<compile_context>
chip_gen: v6e
topology: v6e:2x2x1
jax: 0.10.0
libtpu: 0.0.40
codegen_flags: <defaults>
</compile_context>

<pallas_src>
import math
import functools

import jax
import jax.numpy as jnp
from jax.experimental import pallas as pl
from jax.experimental.pallas import tpu as pltpu


# ---------------------------------------------------------------------------
# In-kernel math helpers
# ---------------------------------------------------------------------------
def _layer_norm(x, gamma, beta, eps=1e-12):
    u = jnp.mean(x, axis=-1, keepdims=True)
    d = x - u
    s = jnp.mean(d * d, axis=-1, keepdims=True)
    return gamma * (d * jax.lax.rsqrt(s + eps)) + beta   # rsqrt -> EUP slot


def _gelu_tanh(x):
    # tanh-approximate GELU (tanh -> EUP slot). ~1e-3 max abs diff vs erf-exact.
    c = math.sqrt(2.0 / math.pi)
    return 0.5 * x * (1.0 + jnp.tanh(c * (x + 0.044715 * x * x * x)))


# ---------------------------------------------------------------------------
# Fused transformer-stack kernel (embedding LN + all layers)
# ---------------------------------------------------------------------------
def bert_stack_kernel(x_ref, mask_ref, lng_ref, lnb_ref,
                      wqkv_ref, bqkv_ref, wo_ref, bo_ref, g1_ref, b1_ref,
                      we_ref, bi_ref, wc_ref, bc_ref, g2_ref, b2_ref,
                      o_ref, *, num_heads, head_size):
    layer = pl.program_id(1)

    @pl.when(layer == 0)
    def _():
        # Embedding LayerNorm fused into the first layer step.
        # (embedding dropout is identity in eval mode)
        o_ref[...] = _layer_norm(x_ref[...], lng_ref[...], lnb_ref[...])

    bt, S, H = o_ref.shape
    R = bt * S

    x = o_ref[...]                       # (bt, S, H) f32, VMEM-resident carry
    x2 = x.reshape(R, H)
    xb = x2.astype(jnp.bfloat16)

    def dense(a_bf16, w_ref, b_ref):
        # bf16 MXU operands, f32 accumulation + f32 bias.
        return (jnp.dot(a_bf16, w_ref[0], preferred_element_type=jnp.float32)
                + b_ref[0])

    scale = 1.0 / math.sqrt(head_size)

    # Fused QKV projection: one (R,H) x (H,3H) MXU matmul.
    qkv = dense(xb, wqkv_ref, bqkv_ref).reshape(bt, S, 3 * H)
    q = (qkv[:, :, 0 * H:1 * H] * scale).astype(jnp.bfloat16)
    k = qkv[:, :, 1 * H:2 * H].astype(jnp.bfloat16)
    v = qkv[:, :, 2 * H:3 * H].astype(jnp.bfloat16)

    valid = mask_ref[...] == 1           # (bt, 1, S) -> broadcasts over queries

    head_outs = []
    for h in range(num_heads):           # static loop; one (bt,S,S) tile live at a time
        sl = slice(h * head_size, (h + 1) * head_size)
        s = jnp.einsum('bqd,bkd->bqk', q[:, :, sl], k[:, :, sl],
                       preferred_element_type=jnp.float32)
        s = jnp.where(valid, s, -1e9)
        s = s - jnp.max(s, axis=-1, keepdims=True)
        e = jnp.exp(s)
        p = e * pl.reciprocal(jnp.sum(e, axis=-1, keepdims=True), approx=True)
        head_outs.append(
            jnp.einsum('bqk,bkd->bqd', p.astype(jnp.bfloat16), v[:, :, sl],
                       preferred_element_type=jnp.float32))
    a = jnp.concatenate(head_outs, axis=-1).reshape(R, H)

    # attention dropout / hidden dropout are identity (eval mode).
    a = dense(a.astype(jnp.bfloat16), wo_ref, bo_ref)
    a = _layer_norm(a + x2, g1_ref[0], b1_ref[0])

    m = dense(a.astype(jnp.bfloat16), we_ref, bi_ref)
    m = _gelu_tanh(m)
    m = dense(m.astype(jnp.bfloat16), wc_ref, bc_ref)
    m = _layer_norm(m + a, g2_ref[0], b2_ref[0])

    o_ref[...] = m.reshape(bt, S, H)     # carry for next layer / final output


# ---------------------------------------------------------------------------
# Pooler + pairwise-feature classifier + cross-entropy head kernel
# ---------------------------------------------------------------------------
def pooler_head_kernel(xa_ref, xb_ref, pw_ref, pb_ref, cw_ref, cb_ref,
                       gt_ref, loss_ref):
    def pool(x_ref):
        return jnp.tanh(
            jnp.dot(x_ref[...].astype(jnp.bfloat16), pw_ref[...],
                    preferred_element_type=jnp.float32) + pb_ref[...])

    p1 = pool(xa_ref)                                   # (Bp, H) f32
    p2 = pool(xb_ref)
    feats = jnp.concatenate([p1, p2, jnp.abs(p1 - p2), p1 * p2], axis=-1)
    logits = jnp.dot(feats.astype(jnp.bfloat16), cw_ref[...],
                     preferred_element_type=jnp.float32) + cb_ref[...]

    m = jnp.max(logits, axis=-1, keepdims=True)
    lse = m + jnp.log(jnp.sum(jnp.exp(logits - m), axis=-1, keepdims=True))
    labels = gt_ref[...]                                # (Bp, 1) int32
    onehot = jax.lax.broadcasted_iota(jnp.int32, logits.shape, 1) == labels
    picked = jnp.sum(jnp.where(onehot, logits, 0.0), axis=-1, keepdims=True)
    loss_ref[...] = lse - picked                        # per-example NLL


# ---------------------------------------------------------------------------
# pallas_call wrappers
# ---------------------------------------------------------------------------
def _full_spec(shape):
    n = len(shape)
    return pl.BlockSpec(shape, lambda *_: (0,) * n)


def _pick_batch_tile(n_seqs, seq_len, target_rows=256):
    bt = max(1, min(n_seqs, target_rows // max(seq_len, 1)))
    while n_seqs % bt:                 # must evenly divide the batch
        bt -= 1
    if bt == n_seqs and n_seqs > 1:    # keep >=2 parallel steps (megacore / v7x 2 TCs)
        bt = n_seqs // 2
        while n_seqs % bt:
            bt -= 1
    return max(bt, 1)


_STACKED = ["wqkv", "bqkv", "wo", "bo",
            "g1", "be1", "we", "bie", "wc", "bc", "g2", "be2"]


def bert_encoder(x, mask, params, *, batch_tile=None):
    """x: (n_seqs, S, H) f32 embeddings, mask: (n_seqs, S) int32 -> (n_seqs, S, H)."""
    n_seqs, S, H = x.shape
    L = params["num_layers"]
    nh = params["num_heads"]
    bt = batch_tile or _pick_batch_tile(n_seqs, S)
    mask3 = mask[:, None, :].astype(jnp.int32)          # (n_seqs, 1, S)

    def stacked_spec(name):
        blk = (1,) + params[name].shape[1:]
        return pl.BlockSpec(blk, lambda b, l: (l, 0, 0))

    in_specs = ([pl.BlockSpec((bt, S, H), lambda b, l: (b, 0, 0)),
                 pl.BlockSpec((bt, 1, S), lambda b, l: (b, 0, 0)),
                 pl.BlockSpec((1, H), lambda b, l: (0, 0)),
                 pl.BlockSpec((1, H), lambda b, l: (0, 0))]
                + [stacked_spec(n) for n in _STACKED])

    kern = functools.partial(bert_stack_kernel,
                             num_heads=nh, head_size=H // nh)
    return pl.pallas_call(
        kern,
        out_shape=jax.ShapeDtypeStruct((n_seqs, S, H), jnp.float32),
        grid=(n_seqs // bt, L),
        in_specs=in_specs,
        out_specs=pl.BlockSpec((bt, S, H), lambda b, l: (b, 0, 0)),
        compiler_params=pltpu.CompilerParams(
            dimension_semantics=("parallel", "arbitrary")),
    )(x, mask3, params["ln_g"], params["ln_b"], *[params[n] for n in _STACKED])


def pooler_and_loss(cls_a, cls_b, params, ground_truth):
    """cls_a/cls_b: (Bp, H) [CLS] hidden states of sentence 1 / 2 -> scalar loss."""
    Bp, _ = cls_a.shape
    gt = ground_truth.reshape(Bp, 1).astype(jnp.int32)
    per_example = pl.pallas_call(
        pooler_head_kernel,
        out_shape=jax.ShapeDtypeStruct((Bp, 1), jnp.float32),
        grid=(1,),
        in_specs=[_full_spec(cls_a.shape), _full_spec(cls_b.shape),
                  _full_spec(params["pool_w"].shape), _full_spec(params["pool_b"].shape),
                  _full_spec(params["cls_w"].shape), _full_spec(params["cls_b"].shape),
                  _full_spec(gt.shape)],
        out_specs=_full_spec((Bp, 1)),
    )(cls_a, cls_b, params["pool_w"], params["pool_b"],
      params["cls_w"], params["cls_b"], gt)
    return jnp.mean(per_example)        # CrossEntropyLoss mean reduction (glue)


# ---------------------------------------------------------------------------
# Model: parameters + forward
# ---------------------------------------------------------------------------
def init_params(key, *, vocab_size, hidden, num_layers, num_heads,
                intermediate, max_pos, type_vocab, num_labels,
                init_range=0.02):
    H, I, L = hidden, intermediate, num_layers
    keys = iter(jax.random.split(key, 16))

    def nrm(shape, dtype=jnp.float32):
        return (init_range * jax.random.normal(next(keys), shape)).astype(dtype)

    params = {
        "num_heads": num_heads,
        "num_layers": L,
        # embeddings (f32; gathered in glue)
        "tok_emb": nrm((vocab_size, H)).at[0].set(0.0),    # padding_idx=0
        "pos_emb": nrm((max_pos, H)),
        "type_emb": nrm((type_vocab, H)),
        "ln_g": jnp.ones((1, H), jnp.float32),
        "ln_b": jnp.zeros((1, H), jnp.float32),
        # per-layer weights stacked with a leading layer axis; matmul weights bf16.
        # Q/K/V weights fused along the output dim: (L, H, 3H).
        "wqkv": nrm((L, H, 3 * H), jnp.bfloat16),
        "bqkv": jnp.zeros((L, 1, 3 * H), jnp.float32),
        "wo": nrm((L, H, H), jnp.bfloat16), "bo": jnp.zeros((L, 1, H), jnp.float32),
        "g1": jnp.ones((L, 1, H), jnp.float32), "be1": jnp.zeros((L, 1, H), jnp.float32),
        "we": nrm((L, H, I), jnp.bfloat16), "bie": jnp.zeros((L, 1, I), jnp.float32),
        "wc": nrm((L, I, H), jnp.bfloat16), "bc": jnp.zeros((L, 1, H), jnp.float32),
        "g2": jnp.ones((L, 1, H), jnp.float32), "be2": jnp.zeros((L, 1, H), jnp.float32),
        # pooler + fine-tune classifier head
        "pool_w": nrm((H, H), jnp.bfloat16),
        "pool_b": jnp.zeros((1, H), jnp.float32),
        "cls_w": nrm((4 * H, num_labels), jnp.bfloat16),
        "cls_b": jnp.zeros((1, num_labels), jnp.float32),
    }
    return params


def bert_finetune_forward(params, input_ids, attention_mask, ground_truth):
    """input_ids/attention_mask: (Bp, 2, S) int32, ground_truth: (Bp,) int32 -> loss."""
    Bp, _, S = input_ids.shape
    ids = input_ids.reshape(Bp * 2, S)
    mask = attention_mask.reshape(Bp * 2, S)
    token_type = jnp.zeros_like(ids)
    pos = jnp.broadcast_to(jnp.arange(S, dtype=jnp.int32)[None, :], (Bp * 2, S))

    # Embedding gathers (glue, plain JAX).
    emb = (params["tok_emb"][ids]
           + params["pos_emb"][pos]
           + params["type_emb"][token_type]).astype(jnp.float32)

    # Fused embedding-LN + transformer stack (single pallas_call).
    x = bert_encoder(emb, mask, params)                 # (2*Bp, S, H)

    # [CLS] states, split even/odd rows into the sentence pair (glue).
    cls = x[:, 0, :]
    cls_a, cls_b = cls[0::2], cls[1::2]                 # (Bp, H) each

    # Pooler + pairwise features + classifier + cross-entropy (one kernel).
    return pooler_and_loss(cls_a, cls_b, params, ground_truth)


# ---------------------------------------------------------------------------
if __name__ == "__main__":
    Bp, S = 2, 8                         # pairs, seq len -> 4 sequences through BERT
    cfg = dict(vocab_size=50, hidden=32, num_layers=2, num_heads=4,
               intermediate=64, max_pos=16, type_vocab=2)
    num_labels = 3

    key = jax.random.PRNGKey(0)
    pkey, ikey, gkey = jax.random.split(key, 3)
    params = init_params(pkey, num_labels=num_labels, **cfg)

    input_ids = jax.random.randint(ikey, (Bp, 2, S), 1, cfg["vocab_size"],
                                   dtype=jnp.int32)
    attention_mask = jnp.ones((Bp, 2, S), jnp.int32).at[1, :, -2:].set(0)
    ground_truth = jax.random.randint(gkey, (Bp,), 0, num_labels, dtype=jnp.int32)

    loss = bert_finetune_forward(params, input_ids, attention_mask, ground_truth)
    loss = jax.block_until_ready(loss)
    assert loss.shape == () and bool(jnp.isfinite(loss))
    print("KERNEL_OK")
</pallas_src>

<mosaic_0001>
module attributes {stable_mosaic.version = 11 : i64} {
  func.func @bert_stack_kernel(%arg0: i32, %arg1: i32, %arg2: memref<2x8x32xf32, #tpu.memory_space<vmem>>, %arg3: memref<2x1x8xi32, #tpu.memory_space<vmem>>, %arg4: memref<1x32xf32, #tpu.memory_space<vmem>>, %arg5: memref<1x32xf32, #tpu.memory_space<vmem>>, %arg6: memref<1x32x96xbf16, #tpu.memory_space<vmem>>, %arg7: memref<1x1x96xf32, #tpu.memory_space<vmem>>, %arg8: memref<1x32x32xbf16, #tpu.memory_space<vmem>>, %arg9: memref<1x1x32xf32, #tpu.memory_space<vmem>>, %arg10: memref<1x1x32xf32, #tpu.memory_space<vmem>>, %arg11: memref<1x1x32xf32, #tpu.memory_space<vmem>>, %arg12: memref<1x32x64xbf16, #tpu.memory_space<vmem>>, %arg13: memref<1x1x64xf32, #tpu.memory_space<vmem>>, %arg14: memref<1x64x32xbf16, #tpu.memory_space<vmem>>, %arg15: memref<1x1x32xf32, #tpu.memory_space<vmem>>, %arg16: memref<1x1x32xf32, #tpu.memory_space<vmem>>, %arg17: memref<1x1x32xf32, #tpu.memory_space<vmem>>, %arg18: memref<2x8x32xf32, #tpu.memory_space<vmem>>) attributes {dimension_semantics = [#tpu.dimension_semantics<parallel>, #tpu.dimension_semantics<arbitrary>], iteration_bounds = array<i64: 2, 2>, scalar_prefetch = 0 : i64, scratch_operands = 0 : i64, tpu.core_type = #tpu.core_type<tc>, window_params = [{transform_indices = @transform_0, window_bounds = array<i64: 2, 8, 32>}, {transform_indices = @transform_1, window_bounds = array<i64: 2, 1, 8>}, {pipeline_mode = #tpu.pipeline_mode<synchronous>, transform_indices = @transform_2, window_bounds = array<i64: 1, 32>}, {pipeline_mode = #tpu.pipeline_mode<synchronous>, transform_indices = @transform_3, window_bounds = array<i64: 1, 32>}, {transform_indices = @transform_4, window_bounds = array<i64: 1, 32, 96>}, {transform_indices = @transform_5, window_bounds = array<i64: 1, 1, 96>}, {transform_indices = @transform_6, window_bounds = array<i64: 1, 32, 32>}, {transform_indices = @transform_7, window_bounds = array<i64: 1, 1, 32>}, {transform_indices = @transform_8, window_bounds = array<i64: 1, 1, 32>}, {transform_indices = @transform_9, window_bounds = array<i64: 1, 1, 32>}, {transform_indices = @transform_10, window_bounds = array<i64: 1, 32, 64>}, {transform_indices = @transform_11, window_bounds = array<i64: 1, 1, 64>}, {transform_indices = @transform_12, window_bounds = array<i64: 1, 64, 32>}, {transform_indices = @transform_13, window_bounds = array<i64: 1, 1, 32>}, {transform_indices = @transform_14, window_bounds = array<i64: 1, 1, 32>}, {transform_indices = @transform_15, window_bounds = array<i64: 1, 1, 32>}, {transform_indices = @transform_16, window_bounds = array<i64: 2, 8, 32>}]} {
    %c0_i32 = arith.constant 0 : i32
    %0 = arith.cmpi eq, %arg1, %c0_i32 : i32
    %1 = arith.extui %0 : i1 to i32
    %c0_i32_0 = arith.constant 0 : i32
    %2 = arith.cmpi ne, %1, %c0_i32_0 : i32
    scf.if %2 {
      %c0_83 = arith.constant 0 : index
      %c0_84 = arith.constant 0 : index
      %c0_85 = arith.constant 0 : index
      %196 = vector.load %arg2[%c0_83, %c0_84, %c0_85] : memref<2x8x32xf32, #tpu.memory_space<vmem>>, vector<2x8x32xf32>
      %c0_86 = arith.constant 0 : index
      %c0_87 = arith.constant 0 : index
      %197 = vector.load %arg4[%c0_86, %c0_87] : memref<1x32xf32, #tpu.memory_space<vmem>>, vector<1x32xf32>
      %c0_88 = arith.constant 0 : index
      %c0_89 = arith.constant 0 : index
      %198 = vector.load %arg5[%c0_88, %c0_89] : memref<1x32xf32, #tpu.memory_space<vmem>>, vector<1x32xf32>
      %cst_90 = arith.constant dense<0.000000e+00> : vector<2x8xf32>
      %199 = vector.multi_reduction <add>, %196, %cst_90 [2] : vector<2x8x32xf32> to vector<2x8xf32>
      %200 = vector.shape_cast %199 : vector<2x8xf32> to vector<2x8x1xf32>
      %cst_91 = arith.constant 3.200000e+01 : f32
      %201 = vector.broadcast %cst_91 : f32 to vector<2x8x1xf32>
      %202 = arith.divf %200, %201 : vector<2x8x1xf32>
      %203 = vector.broadcast %202 : vector<2x8x1xf32> to vector<2x8x32xf32>
      %204 = arith.subf %196, %203 : vector<2x8x32xf32>
      %205 = arith.mulf %204, %204 : vector<2x8x32xf32>
      %cst_92 = arith.constant dense<0.000000e+00> : vector<2x8xf32>
      %206 = vector.multi_reduction <add>, %205, %cst_92 [2] : vector<2x8x32xf32> to vector<2x8xf32>
      %207 = vector.shape_cast %206 : vector<2x8xf32> to vector<2x8x1xf32>
      %cst_93 = arith.constant 3.200000e+01 : f32
      %208 = vector.broadcast %cst_93 : f32 to vector<2x8x1xf32>
      %209 = arith.divf %207, %208 : vector<2x8x1xf32>
      %cst_94 = arith.constant 9.99999996E-13 : f32
      %210 = vector.broadcast %cst_94 : f32 to vector<2x8x1xf32>
      %211 = arith.addf %209, %210 : vector<2x8x1xf32>
      %212 = math.rsqrt %211 : vector<2x8x1xf32>
      %213 = vector.broadcast %212 : vector<2x8x1xf32> to vector<2x8x32xf32>
      %214 = arith.mulf %204, %213 : vector<2x8x32xf32>
      %215 = vector.shape_cast %197 : vector<1x32xf32> to vector<1x1x32xf32>
      %216 = vector.broadcast %215 : vector<1x1x32xf32> to vector<2x8x32xf32>
      %217 = arith.mulf %216, %214 : vector<2x8x32xf32>
      %218 = vector.shape_cast %198 : vector<1x32xf32> to vector<1x1x32xf32>
      %219 = vector.broadcast %218 : vector<1x1x32xf32> to vector<2x8x32xf32>
      %220 = arith.addf %217, %219 : vector<2x8x32xf32>
      %c0_95 = arith.constant 0 : index
      %c0_96 = arith.constant 0 : index
      %c0_97 = arith.constant 0 : index
      %221 = vector.load %arg18[%c0_95, %c0_96, %c0_97] : memref<2x8x32xf32, #tpu.memory_space<vmem>>, vector<2x8x32xf32>
      tpu.vector_store %arg18[%c0_95, %c0_96, %c0_97], %220 {strides = array<i32>} : memref<2x8x32xf32, #tpu.memory_space<vmem>>, vector<2x8x32xf32>,
    } else {
    }
    %c0 = arith.constant 0 : index
    %c0_1 = arith.constant 0 : index
    %c0_2 = arith.constant 0 : index
    %3 = vector.load %arg18[%c0, %c0_1, %c0_2] : memref<2x8x32xf32, #tpu.memory_space<vmem>>, vector<2x8x32xf32>
    %4 = vector.shape_cast %3 : vector<2x8x32xf32> to vector<16x32xf32>
    %5 = arith.truncf %4 : vector<16x32xf32> to vector<16x32xbf16>
    %c0_3 = arith.constant 0 : index
    %c0_4 = arith.constant 0 : index
    %c0_5 = arith.constant 0 : index
    %6 = vector.load %arg6[%c0_3, %c0_4, %c0_5] : memref<1x32x96xbf16, #tpu.memory_space<vmem>>, vector<1x32x96xbf16>
    %7 = vector.shape_cast %6 : vector<1x32x96xbf16> to vector<32x96xbf16>
    %cst = arith.constant dense<0.000000e+00> : vector<16x96xf32>
    %8 = tpu.matmul %5, %7, %cst {dimension_numbers = #tpu.dot_dimension_numbers<[1], [0], [0], [1], [0, 0, 1, 1], [], []>} : vector<16x32xbf16>, vector<32x96xbf16>, vector<16x96xf32> -> vector<16x96xf32>
    %c0_6 = arith.constant 0 : index
    %c0_7 = arith.constant 0 : index
    %c0_8 = arith.constant 0 : index
    %9 = vector.load %arg7[%c0_6, %c0_7, %c0_8] : memref<1x1x96xf32, #tpu.memory_space<vmem>>, vector<1x1x96xf32>
    %10 = vector.shape_cast %9 : vector<1x1x96xf32> to vector<1x96xf32>
    %11 = vector.broadcast %10 : vector<1x96xf32> to vector<16x96xf32>
    %12 = arith.addf %8, %11 : vector<16x96xf32>
    %13 = vector.shape_cast %12 : vector<16x96xf32> to vector<2x8x96xf32>
    %14 = vector.extract_strided_slice %13 {offsets = [0, 0, 0], sizes = [2, 8, 32], strides = [1, 1, 1]} : vector<2x8x96xf32> to vector<2x8x32xf32>
    %cst_9 = arith.constant 0.353553385 : f32
    %15 = vector.broadcast %cst_9 : f32 to vector<2x8x32xf32>
    %16 = arith.mulf %14, %15 : vector<2x8x32xf32>
    %17 = arith.truncf %16 : vector<2x8x32xf32> to vector<2x8x32xbf16>
    %18 = vector.extract_strided_slice %13 {offsets = [0, 0, 32], sizes = [2, 8, 32], strides = [1, 1, 1]} : vector<2x8x96xf32> to vector<2x8x32xf32>
    %19 = arith.truncf %18 : vector<2x8x32xf32> to vector<2x8x32xbf16>
    %20 = vector.extract_strided_slice %13 {offsets = [0, 0, 64], sizes = [2, 8, 32], strides = [1, 1, 1]} : vector<2x8x96xf32> to vector<2x8x32xf32>
    %21 = arith.truncf %20 : vector<2x8x32xf32> to vector<2x8x32xbf16>
    %c0_10 = arith.constant 0 : index
    %c0_11 = arith.constant 0 : index
    %c0_12 = arith.constant 0 : index
    %22 = vector.load %arg3[%c0_10, %c0_11, %c0_12] : memref<2x1x8xi32, #tpu.memory_space<vmem>>, vector<2x1x8xi32>
    %c1_i32 = arith.constant 1 : i32
    %23 = vector.broadcast %c1_i32 : i32 to vector<2x1x8xi32>
    %24 = arith.cmpi eq, %22, %23 : vector<2x1x8xi32>
    %25 = vector.extract_strided_slice %17 {offsets = [0, 0, 0], sizes = [2, 8, 8], strides = [1, 1, 1]} : vector<2x8x32xbf16> to vector<2x8x8xbf16>
    %26 = vector.extract_strided_slice %19 {offsets = [0, 0, 0], sizes = [2, 8, 8], strides = [1, 1, 1]} : vector<2x8x32xbf16> to vector<2x8x8xbf16>
    "tpu.trace_start"() <{level = 10 : i32, message = "bqd,bkd->bqk"}> : () -> ()
    %cst_13 = arith.constant dense<0.000000e+00> : vector<2x8x8xf32>
    %27 = tpu.matmul %25, %26, %cst_13 {dimension_numbers = #tpu.dot_dimension_numbers<[2], [2], [1], [1], [0, 0, 0, 1, 1, 1], [0], [0]>} : vector<2x8x8xbf16>, vector<2x8x8xbf16>, vector<2x8x8xf32> -> vector<2x8x8xf32>
    %cst_14 = arith.constant -1.000000e+09 : f32
    "tpu.trace_stop"() : () -> ()
    %28 = vector.shape_cast %24 : vector<2x1x8xi1> to vector<2x1x8xi1>
    %29 = vector.broadcast %28 : vector<2x1x8xi1> to vector<2x8x8xi1>
    %30 = vector.broadcast %cst_14 : f32 to vector<2x8x8xf32>
    %31 = arith.select %29, %27, %30 : vector<2x8x8xi1>, vector<2x8x8xf32>
    %cst_15 = arith.constant dense<0xFF800000> : vector<2x8xf32>
    %32 = vector.multi_reduction <maximumf>, %31, %cst_15 [2] : vector<2x8x8xf32> to vector<2x8xf32>
    %33 = vector.shape_cast %32 : vector<2x8xf32> to vector<2x8x1xf32>
    %34 = vector.broadcast %33 : vector<2x8x1xf32> to vector<2x8x8xf32>
    %35 = arith.subf %31, %34 : vector<2x8x8xf32>
    %36 = math.exp %35 : vector<2x8x8xf32>
    %cst_16 = arith.constant dense<0.000000e+00> : vector<2x8xf32>
    %37 = vector.multi_reduction <add>, %36, %cst_16 [2] : vector<2x8x8xf32> to vector<2x8xf32>
    %38 = vector.shape_cast %37 : vector<2x8xf32> to vector<2x8x1xf32>
    %39 = tpu.reciprocal %38 {approx = true} : vector<2x8x1xf32> -> vector<2x8x1xf32>
    %40 = vector.broadcast %39 : vector<2x8x1xf32> to vector<2x8x8xf32>
    %41 = arith.mulf %36, %40 : vector<2x8x8xf32>
    %42 = arith.truncf %41 : vector<2x8x8xf32> to vector<2x8x8xbf16>
    %43 = vector.extract_strided_slice %21 {offsets = [0, 0, 0], sizes = [2, 8, 8], strides = [1, 1, 1]} : vector<2x8x32xbf16> to vector<2x8x8xbf16>
    "tpu.trace_start"() <{level = 10 : i32, message = "bqk,bkd->bqd"}> : () -> ()
    %cst_17 = arith.constant dense<0.000000e+00> : vector<2x8x8xf32>
    %44 = tpu.matmul %42, %43, %cst_17 {dimension_numbers = #tpu.dot_dimension_numbers<[2], [1], [1], [2], [0, 0, 0, 1, 1, 2], [0], [0]>} : vector<2x8x8xbf16>, vector<2x8x8xbf16>, vector<2x8x8xf32> -> vector<2x8x8xf32>
    "tpu.trace_stop"() : () -> ()
    %45 = vector.extract_strided_slice %17 {offsets = [0, 0, 8], sizes = [2, 8, 8], strides = [1, 1, 1]} : vector<2x8x32xbf16> to vector<2x8x8xbf16>
    %46 = vector.extract_strided_slice %19 {offsets = [0, 0, 8], sizes = [2, 8, 8], strides = [1, 1, 1]} : vector<2x8x32xbf16> to vector<2x8x8xbf16>
    "tpu.trace_start"() <{level = 10 : i32, message = "bqd,bkd->bqk"}> : () -> ()
    %cst_18 = arith.constant dense<0.000000e+00> : vector<2x8x8xf32>
    %47 = tpu.matmul %45, %46, %cst_18 {dimension_numbers = #tpu.dot_dimension_numbers<[2], [2], [1], [1], [0, 0, 0, 1, 1, 1], [0], [0]>} : vector<2x8x8xbf16>, vector<2x8x8xbf16>, vector<2x8x8xf32> -> vector<2x8x8xf32>
    %cst_19 = arith.constant -1.000000e+09 : f32
    "tpu.trace_stop"() : () -> ()
    %48 = vector.shape_cast %24 : vector<2x1x8xi1> to vector<2x1x8xi1>
    %49 = vector.broadcast %48 : vector<2x1x8xi1> to vector<2x8x8xi1>
    %50 = vector.broadcast %cst_19 : f32 to vector<2x8x8xf32>
    %51 = arith.select %49, %47, %50 : vector<2x8x8xi1>, vector<2x8x8xf32>
    %cst_20 = arith.constant dense<0xFF800000> : vector<2x8xf32>
    %52 = vector.multi_reduction <maximumf>, %51, %cst_20 [2] : vector<2x8x8xf32> to vector<2x8xf32>
    %53 = vector.shape_cast %52 : vector<2x8xf32> to vector<2x8x1xf32>
    %54 = vector.broadcast %53 : vector<2x8x1xf32> to vector<2x8x8xf32>
    %55 = arith.subf %51, %54 : vector<2x8x8xf32>
    %56 = math.exp %55 : vector<2x8x8xf32>
    %cst_21 = arith.constant dense<0.000000e+00> : vector<2x8xf32>
    %57 = vector.multi_reduction <add>, %56, %cst_21 [2] : vector<2x8x8xf32> to vector<2x8xf32>
    %58 = vector.shape_cast %57 : vector<2x8xf32> to vector<2x8x1xf32>
    %59 = tpu.reciprocal %58 {approx = true} : vector<2x8x1xf32> -> vector<2x8x1xf32>
    %60 = vector.broadcast %59 : vector<2x8x1xf32> to vector<2x8x8xf32>
    %61 = arith.mulf %56, %60 : vector<2x8x8xf32>
    %62 = arith.truncf %61 : vector<2x8x8xf32> to vector<2x8x8xbf16>
    %63 = vector.extract_strided_slice %21 {offsets = [0, 0, 8], sizes = [2, 8, 8], strides = [1, 1, 1]} : vector<2x8x32xbf16> to vector<2x8x8xbf16>
    "tpu.trace_start"() <{level = 10 : i32, message = "bqk,bkd->bqd"}> : () -> ()
    %cst_22 = arith.constant dense<0.000000e+00> : vector<2x8x8xf32>
    %64 = tpu.matmul %62, %63, %cst_22 {dimension_numbers = #tpu.dot_dimension_numbers<[2], [1], [1], [2], [0, 0, 0, 1, 1, 2], [0], [0]>} : vector<2x8x8xbf16>, vector<2x8x8xbf16>, vector<2x8x8xf32> -> vector<2x8x8xf32>
    "tpu.trace_stop"() : () -> ()
    %65 = vector.extract_strided_slice %17 {offsets = [0, 0, 16], sizes = [2, 8, 8], strides = [1, 1, 1]} : vector<2x8x32xbf16> to vector<2x8x8xbf16>
    %66 = vector.extract_strided_slice %19 {offsets = [0, 0, 16], sizes = [2, 8, 8], strides = [1, 1, 1]} : vector<2x8x32xbf16> to vector<2x8x8xbf16>
    "tpu.trace_start"() <{level = 10 : i32, message = "bqd,bkd->bqk"}> : () -> ()
    %cst_23 = arith.constant dense<0.000000e+00> : vector<2x8x8xf32>
    %67 = tpu.matmul %65, %66, %cst_23 {dimension_numbers = #tpu.dot_dimension_numbers<[2], [2], [1], [1], [0, 0, 0, 1, 1, 1], [0], [0]>} : vector<2x8x8xbf16>, vector<2x8x8xbf16>, vector<2x8x8xf32> -> vector<2x8x8xf32>
    %cst_24 = arith.constant -1.000000e+09 : f32
    "tpu.trace_stop"() : () -> ()
    %68 = vector.shape_cast %24 : vector<2x1x8xi1> to vector<2x1x8xi1>
    %69 = vector.broadcast %68 : vector<2x1x8xi1> to vector<2x8x8xi1>
    %70 = vector.broadcast %cst_24 : f32 to vector<2x8x8xf32>
    %71 = arith.select %69, %67, %70 : vector<2x8x8xi1>, vector<2x8x8xf32>
    %cst_25 = arith.constant dense<0xFF800000> : vector<2x8xf32>
    %72 = vector.multi_reduction <maximumf>, %71, %cst_25 [2] : vector<2x8x8xf32> to vector<2x8xf32>
    %73 = vector.shape_cast %72 : vector<2x8xf32> to vector<2x8x1xf32>
    %74 = vector.broadcast %73 : vector<2x8x1xf32> to vector<2x8x8xf32>
    %75 = arith.subf %71, %74 : vector<2x8x8xf32>
    %76 = math.exp %75 : vector<2x8x8xf32>
    %cst_26 = arith.constant dense<0.000000e+00> : vector<2x8xf32>
    %77 = vector.multi_reduction <add>, %76, %cst_26 [2] : vector<2x8x8xf32> to vector<2x8xf32>
    %78 = vector.shape_cast %77 : vector<2x8xf32> to vector<2x8x1xf32>
    %79 = tpu.reciprocal %78 {approx = true} : vector<2x8x1xf32> -> vector<2x8x1xf32>
    %80 = vector.broadcast %79 : vector<2x8x1xf32> to vector<2x8x8xf32>
    %81 = arith.mulf %76, %80 : vector<2x8x8xf32>
    %82 = arith.truncf %81 : vector<2x8x8xf32> to vector<2x8x8xbf16>
    %83 = vector.extract_strided_slice %21 {offsets = [0, 0, 16], sizes = [2, 8, 8], strides = [1, 1, 1]} : vector<2x8x32xbf16> to vector<2x8x8xbf16>
    "tpu.trace_start"() <{level = 10 : i32, message = "bqk,bkd->bqd"}> : () -> ()
    %cst_27 = arith.constant dense<0.000000e+00> : vector<2x8x8xf32>
    %84 = tpu.matmul %82, %83, %cst_27 {dimension_numbers = #tpu.dot_dimension_numbers<[2], [1], [1], [2], [0, 0, 0, 1, 1, 2], [0], [0]>} : vector<2x8x8xbf16>, vector<2x8x8xbf16>, vector<2x8x8xf32> -> vector<2x8x8xf32>
    "tpu.trace_stop"() : () -> ()
    %85 = vector.extract_strided_slice %17 {offsets = [0, 0, 24], sizes = [2, 8, 8], strides = [1, 1, 1]} : vector<2x8x32xbf16> to vector<2x8x8xbf16>
    %86 = vector.extract_strided_slice %19 {offsets = [0, 0, 24], sizes = [2, 8, 8], strides = [1, 1, 1]} : vector<2x8x32xbf16> to vector<2x8x8xbf16>
    "tpu.trace_start"() <{level = 10 : i32, message = "bqd,bkd->bqk"}> : () -> ()
    %cst_28 = arith.constant dense<0.000000e+00> : vector<2x8x8xf32>
    %87 = tpu.matmul %85, %86, %cst_28 {dimension_numbers = #tpu.dot_dimension_numbers<[2], [2], [1], [1], [0, 0, 0, 1, 1, 1], [0], [0]>} : vector<2x8x8xbf16>, vector<2x8x8xbf16>, vector<2x8x8xf32> -> vector<2x8x8xf32>
    %cst_29 = arith.constant -1.000000e+09 : f32
    "tpu.trace_stop"() : () -> ()
    %88 = vector.shape_cast %24 : vector<2x1x8xi1> to vector<2x1x8xi1>
    %89 = vector.broadcast %88 : vector<2x1x8xi1> to vector<2x8x8xi1>
    %90 = vector.broadcast %cst_29 : f32 to vector<2x8x8xf32>
    %91 = arith.select %89, %87, %90 : vector<2x8x8xi1>, vector<2x8x8xf32>
    %cst_30 = arith.constant dense<0xFF800000> : vector<2x8xf32>
    %92 = vector.multi_reduction <maximumf>, %91, %cst_30 [2] : vector<2x8x8xf32> to vector<2x8xf32>
    %93 = vector.shape_cast %92 : vector<2x8xf32> to vector<2x8x1xf32>
    %94 = vector.broadcast %93 : vector<2x8x1xf32> to vector<2x8x8xf32>
    %95 = arith.subf %91, %94 : vector<2x8x8xf32>
    %96 = math.exp %95 : vector<2x8x8xf32>
    %cst_31 = arith.constant dense<0.000000e+00> : vector<2x8xf32>
    %97 = vector.multi_reduction <add>, %96, %cst_31 [2] : vector<2x8x8xf32> to vector<2x8xf32>
    %98 = vector.shape_cast %97 : vector<2x8xf32> to vector<2x8x1xf32>
    %99 = tpu.reciprocal %98 {approx = true} : vector<2x8x1xf32> -> vector<2x8x1xf32>
    %100 = vector.broadcast %99 : vector<2x8x1xf32> to vector<2x8x8xf32>
    %101 = arith.mulf %96, %100 : vector<2x8x8xf32>
    %102 = arith.truncf %101 : vector<2x8x8xf32> to vector<2x8x8xbf16>
    %103 = vector.extract_strided_slice %21 {offsets = [0, 0, 24], sizes = [2, 8, 8], strides = [1, 1, 1]} : vector<2x8x32xbf16> to vector<2x8x8xbf16>
    "tpu.trace_start"() <{level = 10 : i32, message = "bqk,bkd->bqd"}> : () -> ()
    %cst_32 = arith.constant dense<0.000000e+00> : vector<2x8x8xf32>
    %104 = tpu.matmul %102, %103, %cst_32 {dimension_numbers = #tpu.dot_dimension_numbers<[2], [1], [1], [2], [0, 0, 0, 1, 1, 2], [0], [0]>} : vector<2x8x8xbf16>, vector<2x8x8xbf16>, vector<2x8x8xf32> -> vector<2x8x8xf32>
    "tpu.trace_stop"() : () -> ()
    %105 = tpu.concatenate %44, %64, %84, %104 in 2 : vector<2x8x8xf32>, vector<2x8x8xf32>, vector<2x8x8xf32>, vector<2x8x8xf32> -> vector<2x8x32xf32>
    %106 = vector.shape_cast %105 : vector<2x8x32xf32> to vector<16x32xf32>
    %107 = arith.truncf %106 : vector<16x32xf32> to vector<16x32xbf16>
    %c0_33 = arith.constant 0 : index
    %c0_34 = arith.constant 0 : index
    %c0_35 = arith.constant 0 : index
    %108 = vector.load %arg8[%c0_33, %c0_34, %c0_35] : memref<1x32x32xbf16, #tpu.memory_space<vmem>>, vector<1x32x32xbf16>
    %109 = vector.shape_cast %108 : vector<1x32x32xbf16> to vector<32x32xbf16>
    %cst_36 = arith.constant dense<0.000000e+00> : vector<16x32xf32>
    %110 = tpu.matmul %107, %109, %cst_36 {dimension_numbers = #tpu.dot_dimension_numbers<[1], [0], [0], [1], [0, 0, 1, 1], [], []>} : vector<16x32xbf16>, vector<32x32xbf16>, vector<16x32xf32> -> vector<16x32xf32>
    %c0_37 = arith.constant 0 : index
    %c0_38 = arith.constant 0 : index
    %c0_39 = arith.constant 0 : index
    %111 = vector.load %arg9[%c0_37, %c0_38, %c0_39] : memref<1x1x32xf32, #tpu.memory_space<vmem>>, vector<1x1x32xf32>
    %112 = vector.shape_cast %111 : vector<1x1x32xf32> to vector<1x32xf32>
    %113 = vector.broadcast %112 : vector<1x32xf32> to vector<16x32xf32>
    %114 = arith.addf %110, %113 : vector<16x32xf32>
    %115 = arith.addf %114, %4 : vector<16x32xf32>
    %c0_40 = arith.constant 0 : index
    %c0_41 = arith.constant 0 : index
    %c0_42 = arith.constant 0 : index
    %116 = vector.load %arg10[%c0_40, %c0_41, %c0_42] : memref<1x1x32xf32, #tpu.memory_space<vmem>>, vector<1x1x32xf32>
    %117 = vector.shape_cast %116 : vector<1x1x32xf32> to vector<1x32xf32>
    %c0_43 = arith.constant 0 : index
    %c0_44 = arith.constant 0 : index
    %c0_45 = arith.constant 0 : index
    %118 = vector.load %arg11[%c0_43, %c0_44, %c0_45] : memref<1x1x32xf32, #tpu.memory_space<vmem>>, vector<1x1x32xf32>
    %119 = vector.shape_cast %118 : vector<1x1x32xf32> to vector<1x32xf32>
    %cst_46 = arith.constant dense<0.000000e+00> : vector<16xf32>
    %120 = vector.multi_reduction <add>, %115, %cst_46 [1] : vector<16x32xf32> to vector<16xf32>
    %121 = vector.shape_cast %120 : vector<16xf32> to vector<16x1xf32>
    %cst_47 = arith.constant 3.200000e+01 : f32
    %122 = vector.broadcast %cst_47 : f32 to vector<16x1xf32>
    %123 = arith.divf %121, %122 : vector<16x1xf32>
    %124 = vector.broadcast %123 : vector<16x1xf32> to vector<16x32xf32>
    %125 = arith.subf %115, %124 : vector<16x32xf32>
    %126 = arith.mulf %125, %125 : vector<16x32xf32>
    %cst_48 = arith.constant dense<0.000000e+00> : vector<16xf32>
    %127 = vector.multi_reduction <add>, %126, %cst_48 [1] : vector<16x32xf32> to vector<16xf32>
    %128 = vector.shape_cast %127 : vector<16xf32> to vector<16x1xf32>
    %cst_49 = arith.constant 3.200000e+01 : f32
    %129 = vector.broadcast %cst_49 : f32 to vector<16x1xf32>
    %130 = arith.divf %128, %129 : vector<16x1xf32>
    %cst_50 = arith.constant 9.99999996E-13 : f32
    %131 = vector.broadcast %cst_50 : f32 to vector<16x1xf32>
    %132 = arith.addf %130, %131 : vector<16x1xf32>
    %133 = math.rsqrt %132 : vector<16x1xf32>
    %134 = vector.broadcast %133 : vector<16x1xf32> to vector<16x32xf32>
    %135 = arith.mulf %125, %134 : vector<16x32xf32>
    %136 = vector.broadcast %117 : vector<1x32xf32> to vector<16x32xf32>
    %137 = arith.mulf %136, %135 : vector<16x32xf32>
    %138 = vector.broadcast %119 : vector<1x32xf32> to vector<16x32xf32>
    %139 = arith.addf %137, %138 : vector<16x32xf32>
    %140 = arith.truncf %139 : vector<16x32xf32> to vector<16x32xbf16>
    %c0_51 = arith.constant 0 : index
    %c0_52 = arith.constant 0 : index
    %c0_53 = arith.constant 0 : index
    %141 = vector.load %arg12[%c0_51, %c0_52, %c0_53] : memref<1x32x64xbf16, #tpu.memory_space<vmem>>, vector<1x32x64xbf16>
    %142 = vector.shape_cast %141 : vector<1x32x64xbf16> to vector<32x64xbf16>
    %cst_54 = arith.constant dense<0.000000e+00> : vector<16x64xf32>
    %143 = tpu.matmul %140, %142, %cst_54 {dimension_numbers = #tpu.dot_dimension_numbers<[1], [0], [0], [1], [0, 0, 1, 1], [], []>} : vector<16x32xbf16>, vector<32x64xbf16>, vector<16x64xf32> -> vector<16x64xf32>
    %c0_55 = arith.constant 0 : index
    %c0_56 = arith.constant 0 : index
    %c0_57 = arith.constant 0 : index
    %144 = vector.load %arg13[%c0_55, %c0_56, %c0_57] : memref<1x1x64xf32, #tpu.memory_space<vmem>>, vector<1x1x64xf32>
    %145 = vector.shape_cast %144 : vector<1x1x64xf32> to vector<1x64xf32>
    %146 = vector.broadcast %145 : vector<1x64xf32> to vector<16x64xf32>
    %147 = arith.addf %143, %146 : vector<16x64xf32>
    %cst_58 = arith.constant 5.000000e-01 : f32
    %148 = vector.broadcast %cst_58 : f32 to vector<16x64xf32>
    %149 = arith.mulf %148, %147 : vector<16x64xf32>
    %cst_59 = arith.constant 4.471500e-02 : f32
    %150 = vector.broadcast %cst_59 : f32 to vector<16x64xf32>
    %151 = arith.mulf %150, %147 : vector<16x64xf32>
    %152 = arith.mulf %151, %147 : vector<16x64xf32>
    %153 = arith.mulf %152, %147 : vector<16x64xf32>
    %154 = arith.addf %147, %153 : vector<16x64xf32>
    %cst_60 = arith.constant 0.797884583 : f32
    %155 = vector.broadcast %cst_60 : f32 to vector<16x64xf32>
    %156 = arith.mulf %155, %154 : vector<16x64xf32>
    %157 = math.tanh %156 : vector<16x64xf32>
    %cst_61 = arith.constant 1.000000e+00 : f32
    %158 = vector.broadcast %cst_61 : f32 to vector<16x64xf32>
    %159 = arith.addf %158, %157 : vector<16x64xf32>
    %160 = arith.mulf %149, %159 : vector<16x64xf32>
    %161 = arith.truncf %160 : vector<16x64xf32> to vector<16x64xbf16>
    %c0_62 = arith.constant 0 : index
    %c0_63 = arith.constant 0 : index
    %c0_64 = arith.constant 0 : index
    %162 = vector.load %arg14[%c0_62, %c0_63, %c0_64] : memref<1x64x32xbf16, #tpu.memory_space<vmem>>, vector<1x64x32xbf16>
    %163 = vector.shape_cast %162 : vector<1x64x32xbf16> to vector<64x32xbf16>
    %cst_65 = arith.constant dense<0.000000e+00> : vector<16x32xf32>
    %164 = tpu.matmul %161, %163, %cst_65 {dimension_numbers = #tpu.dot_dimension_numbers<[1], [0], [0], [1], [0, 0, 1, 1], [], []>} : vector<16x64xbf16>, vector<64x32xbf16>, vector<16x32xf32> -> vector<16x32xf32>
    %c0_66 = arith.constant 0 : index
    %c0_67 = arith.constant 0 : index
    %c0_68 = arith.constant 0 : index
    %165 = vector.load %arg15[%c0_66, %c0_67, %c0_68] : memref<1x1x32xf32, #tpu.memory_space<vmem>>, vector<1x1x32xf32>
    %166 = vector.shape_cast %165 : vector<1x1x32xf32> to vector<1x32xf32>
    %167 = vector.broadcast %166 : vector<1x32xf32> to vector<16x32xf32>
    %168 = arith.addf %164, %167 : vector<16x32xf32>
    %169 = arith.addf %168, %139 : vector<16x32xf32>
    %c0_69 = arith.constant 0 : index
    %c0_70 = arith.constant 0 : index
    %c0_71 = arith.constant 0 : index
    %170 = vector.load %arg16[%c0_69, %c0_70, %c0_71] : memref<1x1x32xf32, #tpu.memory_space<vmem>>, vector<1x1x32xf32>
    %171 = vector.shape_cast %170 : vector<1x1x32xf32> to vector<1x32xf32>
    %c0_72 = arith.constant 0 : index
    %c0_73 = arith.constant 0 : index
    %c0_74 = arith.constant 0 : index
    %172 = vector.load %arg17[%c0_72, %c0_73, %c0_74] : memref<1x1x32xf32, #tpu.memory_space<vmem>>, vector<1x1x32xf32>
    %173 = vector.shape_cast %172 : vector<1x1x32xf32> to vector<1x32xf32>
    %cst_75 = arith.constant dense<0.000000e+00> : vector<16xf32>
    %174 = vector.multi_reduction <add>, %169, %cst_75 [1] : vector<16x32xf32> to vector<16xf32>
    %175 = vector.shape_cast %174 : vector<16xf32> to vector<16x1xf32>
    %cst_76 = arith.constant 3.200000e+01 : f32
    %176 = vector.broadcast %cst_76 : f32 to vector<16x1xf32>
    %177 = arith.divf %175, %176 : vector<16x1xf32>
    %178 = vector.broadcast %177 : vector<16x1xf32> to vector<16x32xf32>
    %179 = arith.subf %169, %178 : vector<16x32xf32>
    %180 = arith.mulf %179, %179 : vector<16x32xf32>
    %cst_77 = arith.constant dense<0.000000e+00> : vector<16xf32>
    %181 = vector.multi_reduction <add>, %180, %cst_77 [1] : vector<16x32xf32> to vector<16xf32>
    %182 = vector.shape_cast %181 : vector<16xf32> to vector<16x1xf32>
    %cst_78 = arith.constant 3.200000e+01 : f32
    %183 = vector.broadcast %cst_78 : f32 to vector<16x1xf32>
    %184 = arith.divf %182, %183 : vector<16x1xf32>
    %cst_79 = arith.constant 9.99999996E-13 : f32
    %185 = vector.broadcast %cst_79 : f32 to vector<16x1xf32>
    %186 = arith.addf %184, %185 : vector<16x1xf32>
    %187 = math.rsqrt %186 : vector<16x1xf32>
    %188 = vector.broadcast %187 : vector<16x1xf32> to vector<16x32xf32>
    %189 = arith.mulf %179, %188 : vector<16x32xf32>
    %190 = vector.broadcast %171 : vector<1x32xf32> to vector<16x32xf32>
    %191 = arith.mulf %190, %189 : vector<16x32xf32>
    %192 = vector.broadcast %173 : vector<1x32xf32> to vector<16x32xf32>
    %193 = arith.addf %191, %192 : vector<16x32xf32>
    %194 = vector.shape_cast %193 : vector<16x32xf32> to vector<2x8x32xf32>
    %c0_80 = arith.constant 0 : index
    %c0_81 = arith.constant 0 : index
    %c0_82 = arith.constant 0 : index
    %195 = vector.load %arg18[%c0_80, %c0_81, %c0_82] : memref<2x8x32xf32, #tpu.memory_space<vmem>>, vector<2x8x32xf32>
    tpu.vector_store %arg18[%c0_80, %c0_81, %c0_82], %194 {strides = array<i32>} : memref<2x8x32xf32, #tpu.memory_space<vmem>>, vector<2x8x32xf32>,
    return
  }
  func.func @transform_0(%arg0: i32, %arg1: i32) -> (i32, i32, i32) {
    %c0_i32 = arith.constant 0 : i32
    %c0_i32_0 = arith.constant 0 : i32
    %c0_i32_1 = arith.constant 0 : i32
    return %arg0, %c0_i32, %c0_i32_0 : i32, i32, i32
  }
  func.func @transform_1(%arg0: i32, %arg1: i32) -> (i32, i32, i32) {
    %c0_i32 = arith.constant 0 : i32
    %c0_i32_0 = arith.constant 0 : i32
    %c0_i32_1 = arith.constant 0 : i32
    return %arg0, %c0_i32, %c0_i32_0 : i32, i32, i32
  }
  func.func @transform_2(%arg0: i32, %arg1: i32) -> (i32, i32) {
    %c0_i32 = arith.constant 0 : i32
    %c0_i32_0 = arith.constant 0 : i32
    %c0_i32_1 = arith.constant 0 : i32
    return %c0_i32, %c0_i32_0 : i32, i32
  }
  func.func @transform_3(%arg0: i32, %arg1: i32) -> (i32, i32) {
    %c0_i32 = arith.constant 0 : i32
    %c0_i32_0 = arith.constant 0 : i32
    %c0_i32_1 = arith.constant 0 : i32
    return %c0_i32, %c0_i32_0 : i32, i32
  }
  func.func @transform_4(%arg0: i32, %arg1: i32) -> (i32, i32, i32) {
    %c0_i32 = arith.constant 0 : i32
    %c0_i32_0 = arith.constant 0 : i32
    %c0_i32_1 = arith.constant 0 : i32
    return %arg1, %c0_i32, %c0_i32_0 : i32, i32, i32
  }
  func.func @transform_5(%arg0: i32, %arg1: i32) -> (i32, i32, i32) {
    %c0_i32 = arith.constant 0 : i32
    %c0_i32_0 = arith.constant 0 : i32
    %c0_i32_1 = arith.constant 0 : i32
    return %arg1, %c0_i32, %c0_i32_0 : i32, i32, i32
  }
  func.func @transform_6(%arg0: i32, %arg1: i32) -> (i32, i32, i32) {
    %c0_i32 = arith.constant 0 : i32
    %c0_i32_0 = arith.constant 0 : i32
    %c0_i32_1 = arith.constant 0 : i32
    return %arg1, %c0_i32, %c0_i32_0 : i32, i32, i32
  }
  func.func @transform_7(%arg0: i32, %arg1: i32) -> (i32, i32, i32) {
    %c0_i32 = arith.constant 0 : i32
    %c0_i32_0 = arith.constant 0 : i32
    %c0_i32_1 = arith.constant 0 : i32
    return %arg1, %c0_i32, %c0_i32_0 : i32, i32, i32
  }
  func.func @transform_8(%arg0: i32, %arg1: i32) -> (i32, i32, i32) {
    %c0_i32 = arith.constant 0 : i32
    %c0_i32_0 = arith.constant 0 : i32
    %c0_i32_1 = arith.constant 0 : i32
    return %arg1, %c0_i32, %c0_i32_0 : i32, i32, i32
  }
  func.func @transform_9(%arg0: i32, %arg1: i32) -> (i32, i32, i32) {
    %c0_i32 = arith.constant 0 : i32
    %c0_i32_0 = arith.constant 0 : i32
    %c0_i32_1 = arith.constant 0 : i32
    return %arg1, %c0_i32, %c0_i32_0 : i32, i32, i32
  }
  func.func @transform_10(%arg0: i32, %arg1: i32) -> (i32, i32, i32) {
    %c0_i32 = arith.constant 0 : i32
    %c0_i32_0 = arith.constant 0 : i32
    %c0_i32_1 = arith.constant 0 : i32
    return %arg1, %c0_i32, %c0_i32_0 : i32, i32, i32
  }
  func.func @transform_11(%arg0: i32, %arg1: i32) -> (i32, i32, i32) {
    %c0_i32 = arith.constant 0 : i32
    %c0_i32_0 = arith.constant 0 : i32
    %c0_i32_1 = arith.constant 0 : i32
    return %arg1, %c0_i32, %c0_i32_0 : i32, i32, i32
  }
  func.func @transform_12(%arg0: i32, %arg1: i32) -> (i32, i32, i32) {
    %c0_i32 = arith.constant 0 : i32
    %c0_i32_0 = arith.constant 0 : i32
    %c0_i32_1 = arith.constant 0 : i32
    return %arg1, %c0_i32, %c0_i32_0 : i32, i32, i32
  }
  func.func @transform_13(%arg0: i32, %arg1: i32) -> (i32, i32, i32) {
    %c0_i32 = arith.constant 0 : i32
    %c0_i32_0 = arith.constant 0 : i32
    %c0_i32_1 = arith.constant 0 : i32
    return %arg1, %c0_i32, %c0_i32_0 : i32, i32, i32
  }
  func.func @transform_14(%arg0: i32, %arg1: i32) -> (i32, i32, i32) {
    %c0_i32 = arith.constant 0 : i32
    %c0_i32_0 = arith.constant 0 : i32
    %c0_i32_1 = arith.constant 0 : i32
    return %arg1, %c0_i32, %c0_i32_0 : i32, i32, i32
  }
  func.func @transform_15(%arg0: i32, %arg1: i32) -> (i32, i32, i32) {
    %c0_i32 = arith.constant 0 : i32
    %c0_i32_0 = arith.constant 0 : i32
    %c0_i32_1 = arith.constant 0 : i32
    return %arg1, %c0_i32, %c0_i32_0 : i32, i32, i32
  }
  func.func @transform_16(%arg0: i32, %arg1: i32) -> (i32, i32, i32) {
    %c0_i32 = arith.constant 0 : i32
    %c0_i32_0 = arith.constant 0 : i32
    %c0_i32_1 = arith.constant 0 : i32
    return %arg0, %c0_i32, %c0_i32_0 : i32, i32, i32
  }
}

</mosaic_0001>

<llo_original>
// kernel: tpu_custom_call.1
$region0: #{tpu_custom_call.1}
  #allocation0 [shape = 'u32[]', space=smem, size = 0x4, offset = 0x4, fixed_abs, tag = 'smem constant byte address 0x4 - core index']
  #allocation1 [shape = 'u32[144,128]{1,0:T(1,128)}', space=vmem, size = 0x12000, scoped, tag = 'internal scratch']
  %s0 = inlined_call_operand.vmem [shape: f32[4,8,32], index: 0, kind: input, shape index: {}]
  %s1 = inlined_call_operand.hbm [shape: s32[4,1,8], index: 1, kind: input, shape index: {}]
  %s2 = inlined_call_operand.hbm [shape: f32[1,32], index: 2, kind: input, shape index: {}]
  %s3 = inlined_call_operand.hbm [shape: f32[1,32], index: 3, kind: input, shape index: {}]
  %s4 = inlined_call_operand.vmem [shape: bf16[2,32,96], index: 4, kind: input, shape index: {}]
  %s5 = inlined_call_operand.vmem [shape: f32[2,1,96], index: 5, kind: input, shape index: {}]
  %s6 = inlined_call_operand.vmem [shape: bf16[2,32,32], index: 6, kind: input, shape index: {}]
  %s7 = inlined_call_operand.vmem [shape: f32[2,1,32], index: 7, kind: input, shape index: {}]
  %s8 = inlined_call_operand.vmem [shape: f32[2,1,32], index: 8, kind: input, shape index: {}]
  %s9 = inlined_call_operand.vmem [shape: f32[2,1,32], index: 9, kind: input, shape index: {}]
  %s10 = inlined_call_operand.hbm [shape: bf16[2,32,64], index: 10, kind: input, shape index: {}]
  %s11 = inlined_call_operand.vmem [shape: f32[2,1,64], index: 11, kind: input, shape index: {}]
  %s12 = inlined_call_operand.vmem [shape: bf16[2,64,32], index: 12, kind: input, shape index: {}]
  %s13 = inlined_call_operand.vmem [shape: f32[2,1,32], index: 13, kind: input, shape index: {}]
  %s14 = inlined_call_operand.vmem [shape: f32[2,1,32], index: 14, kind: input, shape index: {}]
  %s15 = inlined_call_operand.vmem [shape: f32[2,1,32], index: 15, kind: input, shape index: {}]
  %s16 = inlined_call_operand.hbm [shape: f32[4,8,32], index: 16, kind: output, shape index: {}]
  %s17 = sld [smem:[#allocation0]]
  $region117: #{tpu_custom_call.1} parent=0
    _
  %s19 = ssub.s32 1, %s17
  %s20 = scalar_select 0, %s19, %s17
  $region1: #{tpu_custom_call.1} parent=0
    #allocation2 [shape = 'u8[2048]{0}', space=vmem, size = 0x800, scoped, tag = 'input window, operand 1']
    #allocation3 [shape = 's32[2]{0}', space=sflag, size = 0x8, scoped, tag = 'scoped memory for tpu_custom_call.1']
    #allocation4 [shape = 's32[2]{0}', space=sflag, size = 0x8, scoped, tag = 'scoped memory for tpu_custom_call.1']
    #allocation5 [shape = 'u8[512]{0}', space=vmem, size = 0x400, scoped, tag = 'input window, operand 2, single buffered']
    #allocation6 [shape = 's32[1]{0}', space=sflag, size = 0x4, scoped, tag = 'scoped memory for tpu_custom_call.1']
    #allocation7 [shape = 'u8[512]{0}', space=vmem, size = 0x400, scoped, tag = 'input window, operand 3, single buffered']
    #allocation8 [shape = 'u8[16384]{0}', space=vmem, size = 0x4000, scoped, tag = 'input window, operand 10']
    #allocation9 [shape = 's32[2]{0}', space=sflag, size = 0x8, scoped, tag = 'scoped memory for tpu_custom_call.1']
    #allocation10 [shape = 'u8[16384]{0}', space=vmem, size = 0x4000, scoped, tag = 'output window, operand 0']
    %21 = vsyncpa [#allocation3], 0
    %s22 = scalar_lea.sflag [#allocation3], 1
    %23 = vsyncpa %s22, 0
    %24 = vsyncpa [#allocation6], 0
    %25 = vsyncpa [#allocation9], 0
    %s26 = scalar_lea.sflag [#allocation9], 1
    %27 = vsyncpa %s26, 0
    %28 = vsyncpa [#allocation4], 0
    %s29 = scalar_lea.sflag [#allocation4], 1
    %30 = vsyncpa %s29, 0
    loop: start=0, step=1, limit=6
    $region2: #{tpu_custom_call.1} parent=1 // loop_pre_header
      _
    $region3: #{tpu_custom_call.1} parent=1 // loop_header
      %s32 = sphi 0, %s36
      %p33 = scmp.ge.s32.totalorder %s32, 6
      %s39 = sphi 0, %s51
      %s40 = sphi 0, %s47
      %s41 = sphi 0, %s39
      %s42 = sphi 0, %s40
      %s43 = sphi 0, %s41
      %s44 = sphi 0, %s42
      %s54 = sphi 0, %s56
      %s57 = sphi 0, %s54
      %s58 = sphi 0, %s57
      %s74 = sphi 0, %s58
      %s80 = sphi 0, %s82
      %s83 = sphi 0, %s80
      %s84 = sphi 0, %s83
      %s100 = sphi 0, %s84
      %s104 = sphi 0, %s104
      %s106 = sphi 0, %s104
      %s107 = sphi 0, %s106
      %s121 = sphi 0, %s107
      %s125 = sphi 0, %s125
      %s127 = sphi 0, %s125
      %s128 = sphi 0, %s127
      %s142 = sphi 0, %s128
      %s148 = sphi 0, %s150
      %s151 = sphi 0, %s148
      %s152 = sphi 0, %s151
      %s168 = sphi 0, %s152
      %s174 = sphi 0, %s176
      %s177 = sphi 0, %s174
      %s178 = sphi 0, %s177
      %s194 = sphi 0, %s178
      %s200 = sphi 0, %s202
      %s203 = sphi 0, %s200
      %s204 = sphi 0, %s203
      %s220 = sphi 0, %s204
      %s226 = sphi 0, %s228
      %s229 = sphi 0, %s226
      %s230 = sphi 0, %s229
      %s246 = sphi 0, %s230
      %s252 = sphi 0, %s254
      %s255 = sphi 0, %s252
      %s256 = sphi 0, %s255
      %s272 = sphi 0, %s256
      %s278 = sphi 0, %s280
      %s281 = sphi 0, %s278
      %s282 = sphi 0, %s281
      %s298 = sphi 0, %s282
      %s304 = sphi 0, %s306
      %s307 = sphi 0, %s304
      %s308 = sphi 0, %s307
      %s324 = sphi 0, %s308
      %s330 = sphi 0, %s332
      %s333 = sphi 0, %s330
      %s334 = sphi 0, %s333
      %s350 = sphi 0, %s334
      %s356 = sphi 0, %s358
      %s359 = sphi 0, %s356
      %s360 = sphi 0, %s359
      %s376 = sphi 0, %s360
      %s382 = sphi 0, %s384
      %s385 = sphi 0, %s382
      %s386 = sphi 0, %s385
      %s402 = sphi 0, %s386
      %s408 = sphi 0, %s410
      %s411 = sphi 0, %s408
      %s412 = sphi 0, %s411
      %s428 = sphi 0, %s412
      %s434 = sphi 0, %s436
      %s437 = sphi 0, %s434
      %s438 = sphi 0, %s437
      %s454 = sphi 0, %s438
      %s460 = sphi 0, %s462
      %s463 = sphi 0, %s460
      %s464 = sphi 0, %s463
      %s480 = sphi 0, %s464
    $region4: #{tpu_custom_call.1} parent=1 // loop_header_branch
      %35 = sbr.rel (%p33) target = $region8
    $region5: #{tpu_custom_call.1} parent=1 // loop_body
      %s37 = ssub.s32 %s32, 1
      %s38 = ssub.s32 %s32, 2
      %s45 = sadd.s32 1, %s40
      %p46 = scmp.ge.s32.totalorder %s45, 2
      %s47 = scalar_select %p46, 0, %s45
      %s48 = sadd.s32 1, %s39
      %s49 = scalar_select %p46, %s48, %s39
      %p50 = scmp.ge.s32.totalorder %s49, 2
      %s51 = scalar_select %p50, 0, %s49
      %s52 = ssub.s32 %s39, %s51
      %p53 = scmp.eq.s32.totalorder %s52, 0
      %s55 = sadd.s32 %s54, 1
      %s56 = scalar_select %p53, %s54, %s55
      %p59 = pneg %p53
      %p60 = scmp.eq.s32.totalorder %s32, 3
      %p61 = por %p59, %p60
      %p62 = scmp.ne.s32.totalorder %s54, %s57
      %p63 = scmp.eq.s32.totalorder %s32, 0
      %p64 = por %p62, %p63
      %p65 = scmp.ne.s32.totalorder %s54, %s57
      %p66 = scmp.eq.s32.totalorder %s37, 3
      %p67 = por %p65, %p66
      %p68 = scmp.ne.s32.totalorder %s57, %s58
      %p69 = scmp.eq.s32.totalorder %s37, 0
      %p70 = por %p68, %p69
      %p71 = scmp.ne.s32.totalorder %s57, %s58
      %p72 = scmp.eq.s32.totalorder %s38, 3
      %p73 = por %p71, %p72
      %p75 = scmp.ne.s32.totalorder %s58, %s74
      %p76 = scmp.eq.s32.totalorder %s38, 0
      %p77 = por %p75, %p76
      %s78 = ssub.s32 %s39, %s51
      %p79 = scmp.eq.s32.totalorder %s78, 0
      %s81 = sadd.s32 %s80, 1
      %s82 = scalar_select %p79, %s80, %s81
      %p85 = pneg %p79
      %p86 = scmp.eq.s32.totalorder %s32, 3
      %p87 = por %p85, %p86
      %p88 = scmp.ne.s32.totalorder %s80, %s83
      %p89 = scmp.eq.s32.totalorder %s32, 0
      %p90 = por %p88, %p89
      %p91 = scmp.ne.s32.totalorder %s80, %s83
      %p92 = scmp.eq.s32.totalorder %s37, 3
      %p93 = por %p91, %p92
      %p94 = scmp.ne.s32.totalorder %s83, %s84
      %p95 = scmp.eq.s32.totalorder %s37, 0
      %p96 = por %p94, %p95
      %p97 = scmp.ne.s32.totalorder %s83, %s84
      %p98 = scmp.eq.s32.totalorder %s38, 3
      %p99 = por %p97, %p98
      %p101 = scmp.ne.s32.totalorder %s84, %s100
      %p102 = scmp.eq.s32.totalorder %s38, 0
      %p103 = por %p101, %p102
      %s105 = sadd.s32 %s104, 1
      %p108 = scmp.eq.s32.totalorder %s32, 3
      %p109 = scmp.ne.s32.totalorder %s104, %s106
      %p110 = scmp.eq.s32.totalorder %s32, 0
      %p111 = por %p109, %p110
      %p112 = scmp.ne.s32.totalorder %s104, %s106
      %p113 = scmp.eq.s32.totalorder %s37, 3
      %p114 = por %p112, %p113
      %p115 = scmp.ne.s32.totalorder %s106, %s107
      %p116 = scmp.eq.s32.totalorder %s37, 0
      %p117 = por %p115, %p116
      %p118 = scmp.ne.s32.totalorder %s106, %s107
      %p119 = scmp.eq.s32.totalorder %s38, 3
      %p120 = por %p118, %p119
      %p122 = scmp.ne.s32.totalorder %s107, %s121
      %p123 = scmp.eq.s32.totalorder %s38, 0
      %p124 = por %p122, %p123
      %s126 = sadd.s32 %s125, 1
      %p129 = scmp.eq.s32.totalorder %s32, 3
      %p130 = scmp.ne.s32.totalorder %s125, %s127
      %p131 = scmp.eq.s32.totalorder %s32, 0
      %p132 = por %p130, %p131
      %p133 = scmp.ne.s32.totalorder %s125, %s127
      %p134 = scmp.eq.s32.totalorder %s37, 3
      %p135 = por %p133, %p134
      %p136 = scmp.ne.s32.totalorder %s127, %s128
      %p137 = scmp.eq.s32.totalorder %s37, 0
      %p138 = por %p136, %p137
      %p139 = scmp.ne.s32.totalorder %s127, %s128
      %p140 = scmp.eq.s32.totalorder %s38, 3
      %p141 = por %p139, %p140
      %p143 = scmp.ne.s32.totalorder %s128, %s142
      %p144 = scmp.eq.s32.totalorder %s38, 0
      %p145 = por %p143, %p144
      %s146 = ssub.s32 %s40, %s47
      %p147 = scmp.eq.s32.totalorder %s146, 0
      %s149 = sadd.s32 %s148, 1
      %s150 = scalar_select %p147, %s148, %s149
      %p153 = pneg %p147
      %p154 = scmp.eq.s32.totalorder %s32, 3
      %p155 = por %p153, %p154
      %p156 = scmp.ne.s32.totalorder %s148, %s151
      %p157 = scmp.eq.s32.totalorder %s32, 0
      %p158 = por %p156, %p157
      %p159 = scmp.ne.s32.totalorder %s148, %s151
      %p160 = scmp.eq.s32.totalorder %s37, 3
      %p161 = por %p159, %p160
      %p162 = scmp.ne.s32.totalorder %s151, %s152
      %p163 = scmp.eq.s32.totalorder %s37, 0
      %p164 = por %p162, %p163
      %p165 = scmp.ne.s32.totalorder %s151, %s152
      %p166 = scmp.eq.s32.totalorder %s38, 3
      %p167 = por %p165, %p166
      %p169 = scmp.ne.s32.totalorder %s152, %s168
      %p170 = scmp.eq.s32.totalorder %s38, 0
      %p171 = por %p169, %p170
      %s172 = ssub.s32 %s40, %s47
      %p173 = scmp.eq.s32.totalorder %s172, 0
      %s175 = sadd.s32 %s174, 1
      %s176 = scalar_select %p173, %s174, %s175
      %p179 = pneg %p173
      %p180 = scmp.eq.s32.totalorder %s32, 3
      %p181 = por %p179, %p180
      %p182 = scmp.ne.s32.totalorder %s174, %s177
      %p183 = scmp.eq.s32.totalorder %s32, 0
      %p184 = por %p182, %p183
      %p185 = scmp.ne.s32.totalorder %s174, %s177
      %p186 = scmp.eq.s32.totalorder %s37, 3
      %p187 = por %p185, %p186
      %p188 = scmp.ne.s32.totalorder %s177, %s178
      %p189 = scmp.eq.s32.totalorder %s37, 0
      %p190 = por %p188, %p189
      %p191 = scmp.ne.s32.totalorder %s177, %s178
      %p192 = scmp.eq.s32.totalorder %s38, 3
      %p193 = por %p191, %p192
      %p195 = scmp.ne.s32.totalorder %s178, %s194
      %p196 = scmp.eq.s32.totalorder %s38, 0
      %p197 = por %p195, %p196
      %s198 = ssub.s32 %s40, %s47
      %p199 = scmp.eq.s32.totalorder %s198, 0
      %s201 = sadd.s32 %s200, 1
      %s202 = scalar_select %p199, %s200, %s201
      %p205 = pneg %p199
      %p206 = scmp.eq.s32.totalorder %s32, 3
      %p207 = por %p205, %p206
      %p208 = scmp.ne.s32.totalorder %s200, %s203
      %p209 = scmp.eq.s32.totalorder %s32, 0
      %p210 = por %p208, %p209
      %p211 = scmp.ne.s32.totalorder %s200, %s203
      %p212 = scmp.eq.s32.totalorder %s37, 3
      %p213 = por %p211, %p212
      %p214 = scmp.ne.s32.totalorder %s203, %s204
      %p215 = scmp.eq.s32.totalorder %s37, 0
      %p216 = por %p214, %p215
      %p217 = scmp.ne.s32.totalorder %s203, %s204
      %p218 = scmp.eq.s32.totalorder %s38, 3
      %p219 = por %p217, %p218
      %p221 = scmp.ne.s32.totalorder %s204, %s220
      %p222 = scmp.eq.s32.totalorder %s38, 0
      %p223 = por %p221, %p222
      %s224 = ssub.s32 %s40, %s47
      %p225 = scmp.eq.s32.totalorder %s224, 0
      %s227 = sadd.s32 %s226, 1
      %s228 = scalar_select %p225, %s226, %s227
      %p231 = pneg %p225
      %p232 = scmp.eq.s32.totalorder %s32, 3
      %p233 = por %p231, %p232
      %p234 = scmp.ne.s32.totalorder %s226, %s229
      %p235 = scmp.eq.s32.totalorder %s32, 0
      %p236 = por %p234, %p235
      %p237 = scmp.ne.s32.totalorder %s226, %s229
      %p238 = scmp.eq.s32.totalorder %s37, 3
      %p239 = por %p237, %p238
      %p240 = scmp.ne.s32.totalorder %s229, %s230
      %p241 = scmp.eq.s32.totalorder %s37, 0
      %p242 = por %p240, %p241
      %p243 = scmp.ne.s32.totalorder %s229, %s230
      %p244 = scmp.eq.s32.totalorder %s38, 3
      %p245 = por %p243, %p244
      %p247 = scmp.ne.s32.totalorder %s230, %s246
      %p248 = scmp.eq.s32.totalorder %s38, 0
      %p249 = por %p247, %p248
      %s250 = ssub.s32 %s40, %s47
      %p251 = scmp.eq.s32.totalorder %s250, 0
      %s253 = sadd.s32 %s252, 1
      %s254 = scalar_select %p251, %s252, %s253
      %p257 = pneg %p251
      %p258 = scmp.eq.s32.totalorder %s32, 3
      %p259 = por %p257, %p258
      %p260 = scmp.ne.s32.totalorder %s252, %s255
      %p261 = scmp.eq.s32.totalorder %s32, 0
      %p262 = por %p260, %p261
      %p263 = scmp.ne.s32.totalorder %s252, %s255
      %p264 = scmp.eq.s32.totalorder %s37, 3
      %p265 = por %p263, %p264
      %p266 = scmp.ne.s32.totalorder %s255, %s256
      %p267 = scmp.eq.s32.totalorder %s37, 0
      %p268 = por %p266, %p267
      %p269 = scmp.ne.s32.totalorder %s255, %s256
      %p270 = scmp.eq.s32.totalorder %s38, 3
      %p271 = por %p269, %p270
      %p273 = scmp.ne.s32.totalorder %s256, %s272
      %p274 = scmp.eq.s32.totalorder %s38, 0
      %p275 = por %p273, %p274
      %s276 = ssub.s32 %s40, %s47
      %p277 = scmp.eq.s32.totalorder %s276, 0
      %s279 = sadd.s32 %s278, 1
      %s280 = scalar_select %p277, %s278, %s279
      %p283 = pneg %p277
      %p284 = scmp.eq.s32.totalorder %s32, 3
      %p285 = por %p283, %p284
      %p286 = scmp.ne.s32.totalorder %s278, %s281
      %p287 = scmp.eq.s32.totalorder %s32, 0
      %p288 = por %p286, %p287
      %p289 = scmp.ne.s32.totalorder %s278, %s281
      %p290 = scmp.eq.s32.totalorder %s37, 3
      %p291 = por %p289, %p290
      %p292 = scmp.ne.s32.totalorder %s281, %s282
      %p293 = scmp.eq.s32.totalorder %s37, 0
      %p294 = por %p292, %p293
      %p295 = scmp.ne.s32.totalorder %s281, %s282
      %p296 = scmp.eq.s32.totalorder %s38, 3
      %p297 = por %p295, %p296
      %p299 = scmp.ne.s32.totalorder %s282, %s298
      %p300 = scmp.eq.s32.totalorder %s38, 0
      %p301 = por %p299, %p300
      %s302 = ssub.s32 %s40, %s47
      %p303 = scmp.eq.s32.totalorder %s302, 0
      %s305 = sadd.s32 %s304, 1
      %s306 = scalar_select %p303, %s304, %s305
      %p309 = pneg %p303
      %p310 = scmp.eq.s32.totalorder %s32, 3
      %p311 = por %p309, %p310
      %p312 = scmp.ne.s32.totalorder %s304, %s307
      %p313 = scmp.eq.s32.totalorder %s32, 0
      %p314 = por %p312, %p313
      %p315 = scmp.ne.s32.totalorder %s304, %s307
      %p316 = scmp.eq.s32.totalorder %s37, 3
      %p317 = por %p315, %p316
      %p318 = scmp.ne.s32.totalorder %s307, %s308
      %p319 = scmp.eq.s32.totalorder %s37, 0
      %p320 = por %p318, %p319
      %p321 = scmp.ne.s32.totalorder %s307, %s308
      %p322 = scmp.eq.s32.totalorder %s38, 3
      %p323 = por %p321, %p322
      %p325 = scmp.ne.s32.totalorder %s308, %s324
      %p326 = scmp.eq.s32.totalorder %s38, 0
      %p327 = por %p325, %p326
      %s328 = ssub.s32 %s40, %s47
      %p329 = scmp.eq.s32.totalorder %s328, 0
      %s331 = sadd.s32 %s330, 1
      %s332 = scalar_select %p329, %s330, %s331
      %p335 = pneg %p329
      %p336 = scmp.eq.s32.totalorder %s32, 3
      %p337 = por %p335, %p336
      %p338 = scmp.ne.s32.totalorder %s330, %s333
      %p339 = scmp.eq.s32.totalorder %s32, 0
      %p340 = por %p338, %p339
      %p341 = scmp.ne.s32.totalorder %s330, %s333
      %p342 = scmp.eq.s32.totalorder %s37, 3
      %p343 = por %p341, %p342
      %p344 = scmp.ne.s32.totalorder %s333, %s334
      %p345 = scmp.eq.s32.totalorder %s37, 0
      %p346 = por %p344, %p345
      %p347 = scmp.ne.s32.totalorder %s333, %s334
      %p348 = scmp.eq.s32.totalorder %s38, 3
      %p349 = por %p347, %p348
      %p351 = scmp.ne.s32.totalorder %s334, %s350
      %p352 = scmp.eq.s32.totalorder %s38, 0
      %p353 = por %p351, %p352
      %s354 = ssub.s32 %s40, %s47
      %p355 = scmp.eq.s32.totalorder %s354, 0
      %s357 = sadd.s32 %s356, 1
      %s358 = scalar_select %p355, %s356, %s357
      %p361 = pneg %p355
      %p362 = scmp.eq.s32.totalorder %s32, 3
      %p363 = por %p361, %p362
      %p364 = scmp.ne.s32.totalorder %s356, %s359
      %p365 = scmp.eq.s32.totalorder %s32, 0
      %p366 = por %p364, %p365
      %p367 = scmp.ne.s32.totalorder %s356, %s359
      %p368 = scmp.eq.s32.totalorder %s37, 3
      %p369 = por %p367, %p368
      %p370 = scmp.ne.s32.totalorder %s359, %s360
      %p371 = scmp.eq.s32.totalorder %s37, 0
      %p372 = por %p370, %p371
      %p373 = scmp.ne.s32.totalorder %s359, %s360
      %p374 = scmp.eq.s32.totalorder %s38, 3
      %p375 = por %p373, %p374
      %p377 = scmp.ne.s32.totalorder %s360, %s376
      %p378 = scmp.eq.s32.totalorder %s38, 0
      %p379 = por %p377, %p378
      %s380 = ssub.s32 %s40, %s47
      %p381 = scmp.eq.s32.totalorder %s380, 0
      %s383 = sadd.s32 %s382, 1
      %s384 = scalar_select %p381, %s382, %s383
      %p387 = pneg %p381
      %p388 = scmp.eq.s32.totalorder %s32, 3
      %p389 = por %p387, %p388
      %p390 = scmp.ne.s32.totalorder %s382, %s385
      %p391 = scmp.eq.s32.totalorder %s32, 0
      %p392 = por %p390, %p391
      %p393 = scmp.ne.s32.totalorder %s382, %s385
      %p394 = scmp.eq.s32.totalorder %s37, 3
      %p395 = por %p393, %p394
      %p396 = scmp.ne.s32.totalorder %s385, %s386
      %p397 = scmp.eq.s32.totalorder %s37, 0
      %p398 = por %p396, %p397
      %p399 = scmp.ne.s32.totalorder %s385, %s386
      %p400 = scmp.eq.s32.totalorder %s38, 3
      %p401 = por %p399, %p400
      %p403 = scmp.ne.s32.totalorder %s386, %s402
      %p404 = scmp.eq.s32.totalorder %s38, 0
      %p405 = por %p403, %p404
      %s406 = ssub.s32 %s40, %s47
      %p407 = scmp.eq.s32.totalorder %s406, 0
      %s409 = sadd.s32 %s408, 1
      %s410 = scalar_select %p407, %s408, %s409
      %p413 = pneg %p407
      %p414 = scmp.eq.s32.totalorder %s32, 3
      %p415 = por %p413, %p414
      %p416 = scmp.ne.s32.totalorder %s408, %s411
      %p417 = scmp.eq.s32.totalorder %s32, 0
      %p418 = por %p416, %p417
      %p419 = scmp.ne.s32.totalorder %s408, %s411
      %p420 = scmp.eq.s32.totalorder %s37, 3
      %p421 = por %p419, %p420
      %p422 = scmp.ne.s32.totalorder %s411, %s412
      %p423 = scmp.eq.s32.totalorder %s37, 0
      %p424 = por %p422, %p423
      %p425 = scmp.ne.s32.totalorder %s411, %s412
      %p426 = scmp.eq.s32.totalorder %s38, 3
      %p427 = por %p425, %p426
      %p429 = scmp.ne.s32.totalorder %s412, %s428
      %p430 = scmp.eq.s32.totalorder %s38, 0
      %p431 = por %p429, %p430
      %s432 = ssub.s32 %s40, %s47
      %p433 = scmp.eq.s32.totalorder %s432, 0
      %s435 = sadd.s32 %s434, 1
      %s436 = scalar_select %p433, %s434, %s435
      %p439 = pneg %p433
      %p440 = scmp.eq.s32.totalorder %s32, 3
      %p441 = por %p439, %p440
      %p442 = scmp.ne.s32.totalorder %s434, %s437
      %p443 = scmp.eq.s32.totalorder %s32, 0
      %p444 = por %p442, %p443
      %p445 = scmp.ne.s32.totalorder %s434, %s437
      %p446 = scmp.eq.s32.totalorder %s37, 3
      %p447 = por %p445, %p446
      %p448 = scmp.ne.s32.totalorder %s437, %s438
      %p449 = scmp.eq.s32.totalorder %s37, 0
      %p450 = por %p448, %p449
      %p451 = scmp.ne.s32.totalorder %s437, %s438
      %p452 = scmp.eq.s32.totalorder %s38, 3
      %p453 = por %p451, %p452
      %p455 = scmp.ne.s32.totalorder %s438, %s454
      %p456 = scmp.eq.s32.totalorder %s38, 0
      %p457 = por %p455, %p456
      %s458 = ssub.s32 %s39, %s51
      %p459 = scmp.eq.s32.totalorder %s458, 0
      %s461 = sadd.s32 %s460, 1
      %s462 = scalar_select %p459, %s460, %s461
      %p465 = pneg %p459
      %p466 = scmp.eq.s32.totalorder %s32, 3
      %p467 = por %p465, %p466
      %p468 = scmp.ne.s32.totalorder %s460, %s463
      %p469 = scmp.eq.s32.totalorder %s32, 0
      %p470 = por %p468, %p469
      %p471 = scmp.ne.s32.totalorder %s460, %s463
      %p472 = scmp.eq.s32.totalorder %s37, 3
      %p473 = por %p471, %p472
      %p474 = scmp.ne.s32.totalorder %s463, %s464
      %p475 = scmp.eq.s32.totalorder %s37, 0
      %p476 = por %p474, %p475
      %p477 = scmp.ne.s32.totalorder %s463, %s464
      %p478 = scmp.eq.s32.totalorder %s38, 3
      %p479 = por %p477, %p478
      %p481 = scmp.ne.s32.totalorder %s464, %s480
      %p482 = scmp.eq.s32.totalorder %s38, 0
      %p483 = por %p481, %p482
      %p484 = scmp.le.s32.totalorder 1, %s32
      %p485 = scmp.lt.s32.totalorder %s32, 5
      %p486 = pnand %p484, %p485
      %p487 = pneg %p486
      // Predicated region
      $region9: #{tpu_custom_call.1} parent=5 // pred_check
        _
      $region10: #{tpu_custom_call.1} parent=5 // pred_check_branch
        %489 = sbr.rel (%p486) target = $region12
      $region11: #{tpu_custom_call.1} parent=5 // pred_region
        %s490 = ssub.s32 %s32, 1
        // Predicated region
        $region13: #{tpu_custom_call.1} parent=11 // pred_check
          %p491 = pneg %p117
        $region14: #{tpu_custom_call.1} parent=11 // pred_check_branch
          %493 = sbr.rel (%p491) target = $region16
        $region15: #{tpu_custom_call.1} parent=11 // pred_region
          %s495 = ssub.s32 16, 16
          %496 = vsyncadd [#allocation6], %s495
          %s498 = sshll.u32 [#allocation5], 4
          %s499 = int_to_ptr.vmem [resolvable:$true] %s498
          %501 = dma.hbm_to_vmem [thread:$0]  %s2, 16, %s499, [#allocation6]
        $region16: #{tpu_custom_call.1} parent=11 // pred_fallthru
          _
        // Predicated region
        $region17: #{tpu_custom_call.1} parent=11 // pred_check
          %p502 = pneg %p138
        $region18: #{tpu_custom_call.1} parent=11 // pred_check_branch
          %504 = sbr.rel (%p502) target = $region20
        $region19: #{tpu_custom_call.1} parent=11 // pred_region
          %s506 = ssub.s32 16, 16
          %507 = vsyncadd [#allocation6], %s506
          %s509 = sshll.u32 [#allocation7], 4
          %s510 = int_to_ptr.vmem [resolvable:$true] %s509
          %512 = dma.hbm_to_vmem [thread:$0]  %s3, 16, %s510, [#allocation6]
        $region20: #{tpu_custom_call.1} parent=11 // pred_fallthru
          _
      $region12: #{tpu_custom_call.1} parent=5 // pred_fallthru
        _
      %p513 = scmp.lt.s32.totalorder %s32, 4
      // Predicated region
      $region21: #{tpu_custom_call.1} parent=5 // pred_check
        %p514 = pneg %p513
      $region22: #{tpu_custom_call.1} parent=5 // pred_check_branch
        %516 = sbr.rel (%p514) target = $region24
      $region23: #{tpu_custom_call.1} parent=5 // pred_region
        // Predicated region
        $region25: #{tpu_custom_call.1} parent=23 // pred_check
          %p517 = pneg %p64
        $region26: #{tpu_custom_call.1} parent=23 // pred_check_branch
          %519 = sbr.rel (%p517) target = $region28
        $region27: #{tpu_custom_call.1} parent=23 // pred_region
          %s520 = smul.u32 2, %s39
          %p521 = scmp.lt.s32.totalorder %s520, 3
          %s522 = scalar_select %p521, %s520, 3
          %s523 = smul.addr %s522, 8
          %s524 = scalar_lea.vmem %s0, %s523
          %s525 = smul.u32 2, %s39
        $region28: #{tpu_custom_call.1} parent=23 // pred_fallthru
          _
        // Predicated region
        $region29: #{tpu_custom_call.1} parent=23 // pred_check
          %p526 = pneg %p90
        $region30: #{tpu_custom_call.1} parent=23 // pred_check_branch
          %528 = sbr.rel (%p526) target = $region32
        $region31: #{tpu_custom_call.1} parent=23 // pred_region
          %s529 = sand.u32 %s80, 1
          %s530 = scalar_lea.sflag [#allocation3], %s529
          %s531 = sand.u32 %s80, 1
          %s532 = smul.addr %s531, 2
          %s533 = scalar_lea.vmem [#allocation2], %s532
          %s534 = smul.u32 2, %s39
          %s536 = ssub.s32 32, 32
          %537 = vsyncadd %s530, %s536
          %s538 = smul.addr %s534, 16
          %s539 = scalar_lea.hbm %s1, %s538
          %s540 = sshll.u32 %s533, 4
          %s541 = int_to_ptr.vmem [resolvable:$true] %s540
          %546 = dma.hbm_to_vmem [thread:$0]  %s539, 32, %s541, %s530, 16, 16, 1
        $region32: #{tpu_custom_call.1} parent=23 // pred_fallthru
          _
        // Predicated region
        $region33: #{tpu_custom_call.1} parent=23 // pred_check
          %p547 = pneg %p158
        $region34: #{tpu_custom_call.1} parent=23 // pred_check_branch
          %549 = sbr.rel (%p547) target = $region36
        $region35: #{tpu_custom_call.1} parent=23 // pred_region
          %p550 = scmp.lt.s32.totalorder %s40, 1
          %s551 = scalar_select %p550, %s40, 1
          %s552 = smul.addr %s551, 4
          %s553 = smul.addr %s552, 4
          %s554 = scalar_lea.vmem %s4, %s553
        $region36: #{tpu_custom_call.1} parent=23 // pred_fallthru
          _
        // Predicated region
        $region37: #{tpu_custom_call.1} parent=23 // pred_check
          %p555 = pneg %p184
        $region38: #{tpu_custom_call.1} parent=23 // pred_check_branch
          %557 = sbr.rel (%p555) target = $region40
        $region39: #{tpu_custom_call.1} parent=23 // pred_region
          %p558 = scmp.lt.s32.totalorder %s40, 1
          %s559 = scalar_select %p558, %s40, 1
          %s560 = scalar_lea.vmem %s5, %s559
        $region40: #{tpu_custom_call.1} parent=23 // pred_fallthru
          _
        // Predicated region
        $region41: #{tpu_custom_call.1} parent=23 // pred_check
          %p561 = pneg %p210
        $region42: #{tpu_custom_call.1} parent=23 // pred_check_branch
          %563 = sbr.rel (%p561) target = $region44
        $region43: #{tpu_custom_call.1} parent=23 // pred_region
          %p564 = scmp.lt.s32.totalorder %s40, 1
          %s565 = scalar_select %p564, %s40, 1
          %s566 = smul.addr %s565, 4
          %s567 = smul.addr %s566, 4
          %s568 = scalar_lea.vmem %s6, %s567
        $region44: #{tpu_custom_call.1} parent=23 // pred_fallthru
          _
        // Predicated region
        $region45: #{tpu_custom_call.1} parent=23 // pred_check
          %p569 = pneg %p236
        $region46: #{tpu_custom_call.1} parent=23 // pred_check_branch
          %571 = sbr.rel (%p569) target = $region48
        $region47: #{tpu_custom_call.1} parent=23 // pred_region
          %p572 = scmp.lt.s32.totalorder %s40, 1
          %s573 = scalar_select %p572, %s40, 1
          %s574 = scalar_lea.vmem %s7, %s573
        $region48: #{tpu_custom_call.1} parent=23 // pred_fallthru
          _
        // Predicated region
        $region49: #{tpu_custom_call.1} parent=23 // pred_check
          %p575 = pneg %p262
        $region50: #{tpu_custom_call.1} parent=23 // pred_check_branch
          %577 = sbr.rel (%p575) target = $region52
        $region51: #{tpu_custom_call.1} parent=23 // pred_region
          %p578 = scmp.lt.s32.totalorder %s40, 1
          %s579 = scalar_select %p578, %s40, 1
          %s580 = scalar_lea.vmem %s8, %s579
        $region52: #{tpu_custom_call.1} parent=23 // pred_fallthru
          _
        // Predicated region
        $region53: #{tpu_custom_call.1} parent=23 // pred_check
          %p581 = pneg %p288
        $region54: #{tpu_custom_call.1} parent=23 // pred_check_branch
          %583 = sbr.rel (%p581) target = $region56
        $region55: #{tpu_custom_call.1} parent=23 // pred_region
          %p584 = scmp.lt.s32.totalorder %s40, 1
          %s585 = scalar_select %p584, %s40, 1
          %s586 = scalar_lea.vmem %s9, %s585
        $region56: #{tpu_custom_call.1} parent=23 // pred_fallthru
          _
        // Predicated region
        $region57: #{tpu_custom_call.1} parent=23 // pred_check
          %p587 = pneg %p314
        $region58: #{tpu_custom_call.1} parent=23 // pred_check_branch
          %589 = sbr.rel (%p587) target = $region60
        $region59: #{tpu_custom_call.1} parent=23 // pred_region
          %s590 = sand.u32 %s304, 1
          %s591 = scalar_lea.sflag [#allocation9], %s590
          %s592 = sand.u32 %s304, 1
          %s593 = smul.addr %s592, 16
          %s594 = scalar_lea.vmem [#allocation8], %s593
          %s596 = ssub.s32 256, 256
          %597 = vsyncadd %s591, %s596
          %s598 = smul.addr %s40, 4
          %s599 = smul.addr %s598, 64
          %s600 = scalar_lea.hbm %s10, %s599
          %s601 = sshll.u32 %s594, 4
          %s602 = int_to_ptr.vmem [resolvable:$true] %s601
          %607 = dma.hbm_to_vmem [thread:$0]  %s600, 256, %s602, %s591, 64, 64, 4
        $region60: #{tpu_custom_call.1} parent=23 // pred_fallthru
          _
        // Predicated region
        $region61: #{tpu_custom_call.1} parent=23 // pred_check
          %p608 = pneg %p340
        $region62: #{tpu_custom_call.1} parent=23 // pred_check_branch
          %610 = sbr.rel (%p608) target = $region64
        $region63: #{tpu_custom_call.1} parent=23 // pred_region
          %p611 = scmp.lt.s32.totalorder %s40, 1
          %s612 = scalar_select %p611, %s40, 1
          %s613 = scalar_lea.vmem %s11, %s612
        $region64: #{tpu_custom_call.1} parent=23 // pred_fallthru
          _
        // Predicated region
        $region65: #{tpu_custom_call.1} parent=23 // pred_check
          %p614 = pneg %p366
        $region66: #{tpu_custom_call.1} parent=23 // pred_check_branch
          %616 = sbr.rel (%p614) target = $region68
        $region67: #{tpu_custom_call.1} parent=23 // pred_region
          %p617 = scmp.lt.s32.totalorder %s40, 1
          %s618 = scalar_select %p617, %s40, 1
          %s619 = smul.addr %s618, 8
          %s620 = smul.addr %s619, 4
          %s621 = scalar_lea.vmem %s12, %s620
        $region68: #{tpu_custom_call.1} parent=23 // pred_fallthru
          _
        // Predicated region
        $region69: #{tpu_custom_call.1} parent=23 // pred_check
          %p622 = pneg %p392
        $region70: #{tpu_custom_call.1} parent=23 // pred_check_branch
          %624 = sbr.rel (%p622) target = $region72
        $region71: #{tpu_custom_call.1} parent=23 // pred_region
          %p625 = scmp.lt.s32.totalorder %s40, 1
          %s626 = scalar_select %p625, %s40, 1
          %s627 = scalar_lea.vmem %s13, %s626
        $region72: #{tpu_custom_call.1} parent=23 // pred_fallthru
          _
        // Predicated region
        $region73: #{tpu_custom_call.1} parent=23 // pred_check
          %p628 = pneg %p418
        $region74: #{tpu_custom_call.1} parent=23 // pred_check_branch
          %630 = sbr.rel (%p628) target = $region76
        $region75: #{tpu_custom_call.1} parent=23 // pred_region
          %p631 = scmp.lt.s32.totalorder %s40, 1
          %s632 = scalar_select %p631, %s40, 1
          %s633 = scalar_lea.vmem %s14, %s632
        $region76: #{tpu_custom_call.1} parent=23 // pred_fallthru
          _
        // Predicated region
        $region77: #{tpu_custom_call.1} parent=23 // pred_check
          %p634 = pneg %p444
        $region78: #{tpu_custom_call.1} parent=23 // pred_check_branch
          %636 = sbr.rel (%p634) target = $region80
        $region79: #{tpu_custom_call.1} parent=23 // pred_region
          %p637 = scmp.lt.s32.totalorder %s40, 1
          %s638 = scalar_select %p637, %s40, 1
          %s639 = scalar_lea.vmem %s15, %s638
        $region80: #{tpu_custom_call.1} parent=23 // pred_fallthru
          _
      $region24: #{tpu_custom_call.1} parent=5 // pred_fallthru
        _
      %p640 = scmp.le.s32.totalorder 1, %s32
      %p641 = scmp.lt.s32.totalorder %s32, 5
      %p642 = pnand %p640, %p641
      %p643 = pneg %p642
      // Predicated region
      $region81: #{tpu_custom_call.1} parent=5 // pred_check
        _
      $region82: #{tpu_custom_call.1} parent=5 // pred_check_branch
        %645 = sbr.rel (%p642) target = $region84
      $region83: #{tpu_custom_call.1} parent=5 // pred_region
        %s646 = ssub.s32 %s32, 1
        %s647 = sand.u32 %s83, 1
        %s648 = scalar_lea.sflag [#allocation3], %s647
        %s649 = sand.u32 %s83, 1
        %s650 = smul.addr %s649, 2
        %s651 = scalar_lea.vmem [#allocation2], %s650
        // Predicated region
        $region85: #{tpu_custom_call.1} parent=83 // pred_check
          %p652 = pneg %p96
        $region86: #{tpu_custom_call.1} parent=83 // pred_check_branch
          %654 = sbr.rel (%p652) target = $region88
        $region87: #{tpu_custom_call.1} parent=83 // pred_region
          %655 = dma.done %s648, 32
        $region88: #{tpu_custom_call.1} parent=83 // pred_fallthru
          _
        // Predicated region
        $region89: #{tpu_custom_call.1} parent=83 // pred_check
          %p656 = pneg %p117
        $region90: #{tpu_custom_call.1} parent=83 // pred_check_branch
          %658 = sbr.rel (%p656) target = $region92
        $region91: #{tpu_custom_call.1} parent=83 // pred_region
          %659 = dma.done [#allocation6], 16
        $region92: #{tpu_custom_call.1} parent=83 // pred_fallthru
          _
        // Predicated region
        $region93: #{tpu_custom_call.1} parent=83 // pred_check
          %p660 = pneg %p138
        $region94: #{tpu_custom_call.1} parent=83 // pred_check_branch
          %662 = sbr.rel (%p660) target = $region96
        $region95: #{tpu_custom_call.1} parent=83 // pred_region
          %663 = dma.done [#allocation6], 16
        $region96: #{tpu_custom_call.1} parent=83 // pred_fallthru
          _
        %s664 = sand.u32 %s307, 1
        %s665 = scalar_lea.sflag [#allocation9], %s664
        %s666 = sand.u32 %s307, 1
        %s667 = smul.addr %s666, 16
        %s668 = scalar_lea.vmem [#allocation8], %s667
        // Predicated region
        $region97: #{tpu_custom_call.1} parent=83 // pred_check
          %p669 = pneg %p320
        $region98: #{tpu_custom_call.1} parent=83 // pred_check_branch
          %671 = sbr.rel (%p669) target = $region100
        $region99: #{tpu_custom_call.1} parent=83 // pred_region
          %672 = dma.done %s665, 256
        $region100: #{tpu_custom_call.1} parent=83 // pred_fallthru
          _
        %s673 = smul.u32 2, %s41
        %p674 = scmp.lt.s32.totalorder %s673, 3
        %s675 = scalar_select %p674, %s673, 3
        %s676 = smul.addr %s675, 8
        %s677 = scalar_lea.vmem %s0, %s676
        %p678 = pneg %p70
        %p679 = pneg %p67
        %s680 = sand.u32 %s83, 1
        %s681 = scalar_lea.sflag [#allocation3], %s680
        %s682 = sand.u32 %s83, 1
        %s683 = smul.addr %s682, 2
        %s684 = scalar_lea.vmem [#allocation2], %s683
        %p685 = pneg %p96
        %p686 = pneg %p93
        %p687 = pneg %p117
        %p688 = pneg %p114
        %p689 = pneg %p138
        %p690 = pneg %p135
        %p691 = scmp.lt.s32.totalorder %s42, 1
        %s692 = scalar_select %p691, %s42, 1
        %s693 = smul.addr %s692, 4
        %s694 = smul.addr %s693, 4
        %s695 = scalar_lea.vmem %s4, %s694
        %p696 = pneg %p164
        %p697 = pneg %p161
        %p698 = scmp.lt.s32.totalorder %s42, 1
        %s699 = scalar_select %p698, %s42, 1
        %s700 = scalar_lea.vmem %s5, %s699
        %p701 = pneg %p190
        %p702 = pneg %p187
        %p703 = scmp.lt.s32.totalorder %s42, 1
        %s704 = scalar_select %p703, %s42, 1
        %s705 = smul.addr %s704, 4
        %s706 = smul.addr %s705, 4
        %s707 = scalar_lea.vmem %s6, %s706
        %p708 = pneg %p216
        %p709 = pneg %p213
        %p710 = scmp.lt.s32.totalorder %s42, 1
        %s711 = scalar_select %p710, %s42, 1
        %s712 = scalar_lea.vmem %s7, %s711
        %p713 = pneg %p242
        %p714 = pneg %p239
        %p715 = scmp.lt.s32.totalorder %s42, 1
        %s716 = scalar_select %p715, %s42, 1
        %s717 = scalar_lea.vmem %s8, %s716
        %p718 = pneg %p268
        %p719 = pneg %p265
        %p720 = scmp.lt.s32.totalorder %s42, 1
        %s721 = scalar_select %p720, %s42, 1
        %s722 = scalar_lea.vmem %s9, %s721
        %p723 = pneg %p294
        %p724 = pneg %p291
        %s725 = sand.u32 %s307, 1
        %s726 = scalar_lea.sflag [#allocation9], %s725
        %s727 = sand.u32 %s307, 1
        %s728 = smul.addr %s727, 16
        %s729 = scalar_lea.vmem [#allocation8], %s728
        %p730 = pneg %p320
        %p731 = pneg %p317
        %p732 = scmp.lt.s32.totalorder %s42, 1
        %s733 = scalar_select %p732, %s42, 1
        %s734 = scalar_lea.vmem %s11, %s733
        %p735 = pneg %p346
        %p736 = pneg %p343
        %p737 = scmp.lt.s32.totalorder %s42, 1
        %s738 = scalar_select %p737, %s42, 1
        %s739 = smul.addr %s738, 8
        %s740 = smul.addr %s739, 4
        %s741 = scalar_lea.vmem %s12, %s740
        %p742 = pneg %p372
        %p743 = pneg %p369
        %p744 = scmp.lt.s32.totalorder %s42, 1
        %s745 = scalar_select %p744, %s42, 1
        %s746 = scalar_lea.vmem %s13, %s745
        %p747 = pneg %p398
        %p748 = pneg %p395
        %p749 = scmp.lt.s32.totalorder %s42, 1
        %s750 = scalar_select %p749, %s42, 1
        %s751 = scalar_lea.vmem %s14, %s750
        %p752 = pneg %p424
        %p753 = pneg %p421
        %p754 = scmp.lt.s32.totalorder %s42, 1
        %s755 = scalar_select %p754, %s42, 1
        %s756 = scalar_lea.vmem %s15, %s755
        %p757 = pneg %p450
        %p758 = pneg %p447
        %p759 = pneg %p476
        %p760 = pneg %p473
        %s761 = sand.u32 %s463, 1
        %s762 = scalar_lea.sflag [#allocation4], %s761
        %s763 = sand.u32 %s463, 1
        %s764 = smul.addr %s763, 16
        %s765 = scalar_lea.vmem [#allocation10], %s764
        %s766 = smul.u32 2, %s41
        %p767 = scmp.lt.s32.totalorder %s766, 3
        %s768 = scalar_select %p767, %s766, 3
        %s769 = smul.addr %s768, 8
        %s770 = scalar_lea.vmem %s0, %s769
        %s771 = smul.u32 2, %s41
        %s772 = smul.u32 2, %s41
        %p773 = scmp.lt.s32.totalorder %s42, 1
        %s774 = scalar_select %p773, %s42, 1
        %s775 = smul.addr %s774, 4
        %s776 = smul.addr %s775, 4
        %s777 = scalar_lea.vmem %s4, %s776
        %p778 = scmp.lt.s32.totalorder %s42, 1
        %s779 = scalar_select %p778, %s42, 1
        %s780 = scalar_lea.vmem %s5, %s779
        %p781 = scmp.lt.s32.totalorder %s42, 1
        %s782 = scalar_select %p781, %s42, 1
        %s783 = smul.addr %s782, 4
        %s784 = smul.addr %s783, 4
        %s785 = scalar_lea.vmem %s6, %s784
        %p786 = scmp.lt.s32.totalorder %s42, 1
        %s787 = scalar_select %p786, %s42, 1
        %s788 = scalar_lea.vmem %s7, %s787
        %p789 = scmp.lt.s32.totalorder %s42, 1
        %s790 = scalar_select %p789, %s42, 1
        %s791 = scalar_lea.vmem %s8, %s790
        %p792 = scmp.lt.s32.totalorder %s42, 1
        %s793 = scalar_select %p792, %s42, 1
        %s794 = scalar_lea.vmem %s9, %s793
        %p795 = scmp.lt.s32.totalorder %s42, 1
        %s796 = scalar_select %p795, %s42, 1
        %s797 = scalar_lea.vmem %s11, %s796
        %p798 = scmp.lt.s32.totalorder %s42, 1
        %s799 = scalar_select %p798, %s42, 1
        %s800 = smul.addr %s799, 8
        %s801 = smul.addr %s800, 4
        %s802 = scalar_lea.vmem %s12, %s801
        %p803 = scmp.lt.s32.totalorder %s42, 1
        %s804 = scalar_select %p803, %s42, 1
        %s805 = scalar_lea.vmem %s13, %s804
        %p806 = scmp.lt.s32.totalorder %s42, 1
        %s807 = scalar_select %p806, %s42, 1
        %s808 = scalar_lea.vmem %s14, %s807
        %p809 = scmp.lt.s32.totalorder %s42, 1
        %s810 = scalar_select %p809, %s42, 1
        %s811 = scalar_lea.vmem %s15, %s810
        %s812 = smul.u32 2, %s41
        %p814 = scmp.eq.s32.totalorder %s42, 0
        // Predicated region
        $region101: #{tpu_custom_call.1} parent=83 // pred_check
          %p815 = pneg %p814
        $region102: #{tpu_custom_call.1} parent=83 // pred_check_branch
          %817 = sbr.rel (%p815) target = $region104
        $region103: #{tpu_custom_call.1} parent=83 // pred_region
          %v818 = vld [vmem:[%s770] sm:$0xff]
          %v819 = vld [vmem:[%s770 + $0x8] sm:$0xff]
          %v820 = vld [vmem:[#allocation5] sm:$0x1]
          %v821 = vld [vmem:[#allocation7] sm:$0x1]
          %vm822 = vcmask 261120
          %v823 = vsel %vm822, %v818, 0.0
          %824 = vadd.xlane.f32.xlu0 %v823
          %v825 = vpop.xlane.xlu0 %824
          %v826 = vsel %vm822, %v819, 0.0
          %827 = vadd.xlane.f32.xlu0 %v826
          %v828 = vpop.xlane.xlu0 %827
          %v829 = vrcp.pop 32.0
          %v830 = vmul.f32 %v825, %v829
          %v831 = vmul.f32 %v828, %v829
          %v832 = vsub.f32 %v818, %v830
          %v833 = vsub.f32 %v819, %v831
          %v834 = vmul.f32 %v832, %v832
          %v835 = vmul.f32 %v833, %v833
          %v836 = vsel %vm822, %v834, 0.0
          %837 = vadd.xlane.f32.xlu0 %v836
          %v838 = vpop.xlane.xlu0 %837
          %v839 = vsel %vm822, %v835, 0.0
          %840 = vadd.xlane.f32.xlu0 %v839
          %v841 = vpop.xlane.xlu0 %840
          %v842 = vmul.f32 %v838, %v829
          %v843 = vmul.f32 %v841, %v829
          %v844 = vadd.f32 %v842, 1e-12
          %v845 = vadd.f32 %v843, 1e-12
          %v846 = vrsqrt.pop %v844
          %v847 = vrsqrt.pop %v845
          %v848 = vmul.f32 %v832, %v846
          %v849 = vmul.f32 %v833, %v847
          %v851 = vlaneseq
          %v852 = vshrl.u32 %v851, 7
          %v853 = vsub.s32 0, %v852
          %v854 = vrot.slane %v820, %v853
          %v856 = vmul.f32 %v854, %v848
          %v857 = vmul.f32 %v854, %v849
          %v859 = vlaneseq
          %v860 = vshrl.u32 %v859, 7
          %v861 = vsub.s32 0, %v860
          %v862 = vrot.slane %v821, %v861
          %v864 = vadd.f32 %v856, %v862
          %v865 = vadd.f32 %v857, %v862
          %866 = vst.msk [vmem:[%s765] sm:$0xff] %vm822, %v864
          %867 = vst.msk [vmem:[%s765 + $0x8] sm:$0xff] %vm822, %v865
        $region104: #{tpu_custom_call.1} parent=83 // pred_fallthru
          _
        %v868 = vld [vmem:[%s765] sm:$0xff]
        %v869 = vld [vmem:[%s765 + $0x8] sm:$0xff]
        %v870 = vpack.c.bf16 %v869, %v868
        %v871 = vld [vmem:[%s777] sm:$0xf]
        %v872 = vld [vmem:[%s777 + $0x4] sm:$0xf]
        %v873 = vld [vmem:[%s777 + $0x8] sm:$0xf]
        %v874 = vld [vmem:[%s777 + $0xc] sm:$0xf]
        %v875 = vld [vmem:[%s780] sm:$0x1]
        %v877 = vlaneseq
        %v878 = vshrl.u32 %v877, 7
        %v879 = vsub.s32 0, %v878
        %v880 = vrot.slane %v875, %v879
        %v886 = vunpack.c.l.b16 %v871
        %v887 = vunpack.c.l.b16 %v872
        %v888 = vunpack.c.l.b16 %v873
        %v889 = vunpack.c.l.b16 %v874
        %v890 = vpack.c.b16 %v887, %v886
        %v891 = vpack.c.b16 %v889, %v888
        %vm894 = vcmask 261120
        %v896 = vsel %vm894, %v870, 0
        %898 = vmatprep.subr.bf16.mxu0 0
        %899 = vmatpush1.bf16.msra.mxu0 0
        %900 = vmatprep.subr.bf16.mxu0 0
        %901 = vmatpush1.bf16.msra.mxu0 0
        %902 = vmatprep.subr.bf16.mxu0 0
        %903 = vmatpush1.bf16.msra.mxu0 0
        %904 = vmatprep.subr.bf16.mxu0 0
        %905 = vmatpush1.bf16.msra.mxu0 0
        %906 = vmatprep.subr.bf16.mxu0 0
        %907 = vmatpush1.bf16.msra.mxu0 0
        %908 = vmatprep.subr.bf16.mxu0 0
        %909 = vmatpush1.bf16.msra.mxu0 0
        %910 = vmatprep.subr.bf16.mxu0 0
        %911 = vmatpush1.bf16.msra.mxu0 %v891
        %912 = vmatprep.subr.bf16.mxu0 0
        %913 = vmatpush1.bf16.msra.mxu0 %v890
        %914 = vmatprep.subr.bf16.mxu0 0
        %915 = vmatpush2.bf16.msra.mxu0 0
        %916 = vmatprep.subr.bf16.mxu0 0
        %917 = vmatpush2.bf16.msra.mxu0 0
        %918 = vmatprep.subr.bf16.mxu0 0
        %919 = vmatpush2.bf16.msra.mxu0 0
        %920 = vmatprep.subr.bf16.mxu0 0
        %921 = vmatpush2.bf16.msra.mxu0 0
        %922 = vmatprep.subr.bf16.mxu0 0
        %923 = vmatpush2.bf16.msra.mxu0 0
        %924 = vmatprep.subr.bf16.mxu0 0
        %925 = vmatpush2.bf16.msra.mxu0 0
        %926 = vmatprep.subr.bf16.mxu0 0
        %927 = vmatpush2.bf16.msra.mxu0 0
        %928 = vmatprep.subr.bf16.mxu0 0
        %929 = vmatpush2.bf16.msra.mxu0 0
        %930 = vmatprep.mubr.bf16.mxu0 0
        %931 = vmatmul.mubr.bf16.gmra.mxu0 %v896
        %v932 = vpop.f32.mrf.mxu0
        %v933 = vadd.f32 %v880, %v932
        %v934 = vpop.f32.mrf.mxu0
        %v935 = vpop.f32.mrf.mxu0
        %v936 = vadd.f32 %v880, %v935
        %v937 = vpop.f32.mrf.mxu0
        %938 = vdwg.mxu0
        %v939 = vmul.f32 %v933, 0.35355338
        %v940 = vmul.f32 %v936, 0.35355338
        %v941 = vpack.c.bf16 %v939, %v939
        %v942 = vpack.c.bf16 %v940, %v940
        %v943 = vpack.c.bf16 %v933, %v933
        %v944 = vpack.c.bf16 %v936, %v936
        %v945 = vld [vmem:[%s651] sm:$0x1]
        %v946 = vld [vmem:[%s651 + $0x1] sm:$0x1]
        %vm947 = vcmp.eq.s32.totalorder %v945, 1
        %vm948 = vcmp.eq.s32.totalorder %v946, 1
        %950 = vrot.lane.b32.xlu0 %v943, 96
        %v951 = vpop.permute.xlu0 %950
        %vm952 = vcmask 64512
        %v954 = vsel %vm952, %v941, 0
        %v957 = vsel %vm952, %v951, 0
        %959 = vmatprep.subr.bf16.mxu0 0
        %960 = vmatpush1.bf16.xpose.msra.mxu0 0
        %961 = vmatprep.subr.bf16.mxu0 0
        %962 = vmatpush1.bf16.xpose.msra.mxu0 0
        %963 = vmatprep.subr.bf16.mxu0 0
        %964 = vmatpush1.bf16.xpose.msra.mxu0 0
        %965 = vmatprep.subr.bf16.mxu0 0
        %966 = vmatpush1.bf16.xpose.msra.mxu0 0
        %967 = vmatprep.subr.bf16.mxu0 0
        %968 = vmatpush1.bf16.xpose.msra.mxu0 0
        %969 = vmatprep.subr.bf16.mxu0 0
        %970 = vmatpush1.bf16.xpose.msra.mxu0 0
        %971 = vmatprep.subr.bf16.mxu0 0
        %972 = vmatpush1.bf16.xpose.msra.mxu0 0
        %973 = vmatprep.subr.bf16.mxu0 0
        %974 = vmatpush1.bf16.xpose.msra.mxu0 %v957
        %975 = vmatprep.subr.bf16.mxu0 0
        %976 = vmatpush2.bf16.xpose.msra.mxu0 0
        %977 = vmatprep.subr.bf16.mxu0 0
        %978 = vmatpush2.bf16.xpose.msra.mxu0 0
        %979 = vmatprep.subr.bf16.mxu0 0
        %980 = vmatpush2.bf16.xpose.msra.mxu0 0
        %981 = vmatprep.subr.bf16.mxu0 0
        %982 = vmatpush2.bf16.xpose.msra.mxu0 0
        %983 = vmatprep.subr.bf16.mxu0 0
        %984 = vmatpush2.bf16.xpose.msra.mxu0 0
        %985 = vmatprep.subr.bf16.mxu0 0
        %986 = vmatpush2.bf16.xpose.msra.mxu0 0
        %987 = vmatprep.subr.bf16.mxu0 0
        %988 = vmatpush2.bf16.xpose.msra.mxu0 0
        %989 = vmatprep.subr.bf16.mxu0 0
        %990 = vmatpush2.bf16.xpose.msra.mxu0 0
        %991 = vmatprep.mubr.bf16.mxu0 0
        %992 = vmatmul.mubr.bf16.gmra.mxu0 %v954
        %v993 = vpop.f32.mrf.mxu0
        %v994 = vadd.f32 0.0, %v993
        %v995 = vpop.f32.mrf.mxu0
        %v996 = vpop.f32.mrf.mxu0
        %v997 = vpop.f32.mrf.mxu0
        %998 = vdwg.mxu0
        %1000 = vrot.lane.b32.xlu0 %v944, 96
        %v1001 = vpop.permute.xlu0 %1000
        %v1003 = vsel %vm952, %v942, 0
        %v1006 = vsel %vm952, %v1001, 0
        %1008 = vmatprep.subr.bf16.mxu0 0
        %1009 = vmatpush1.bf16.xpose.msra.mxu0 0
        %1010 = vmatprep.subr.bf16.mxu0 0
        %1011 = vmatpush1.bf16.xpose.msra.mxu0 0
        %1012 = vmatprep.subr.bf16.mxu0 0
        %1013 = vmatpush1.bf16.xpose.msra.mxu0 0
        %1014 = vmatprep.subr.bf16.mxu0 0
        %1015 = vmatpush1.bf16.xpose.msra.mxu0 0
        %1016 = vmatprep.subr.bf16.mxu0 0
        %1017 = vmatpush1.bf16.xpose.msra.mxu0 0
        %1018 = vmatprep.subr.bf16.mxu0 0
        %1019 = vmatpush1.bf16.xpose.msra.mxu0 0
        %1020 = vmatprep.subr.bf16.mxu0 0
        %1021 = vmatpush1.bf16.xpose.msra.mxu0 0
        %1022 = vmatprep.subr.bf16.mxu0 0
        %1023 = vmatpush1.bf16.xpose.msra.mxu0 %v1006
        %1024 = vmatprep.subr.bf16.mxu0 0
        %1025 = vmatpush2.bf16.xpose.msra.mxu0 0
        %1026 = vmatprep.subr.bf16.mxu0 0
        %1027 = vmatpush2.bf16.xpose.msra.mxu0 0
        %1028 = vmatprep.subr.bf16.mxu0 0
        %1029 = vmatpush2.bf16.xpose.msra.mxu0 0
        %1030 = vmatprep.subr.bf16.mxu0 0
        %1031 = vmatpush2.bf16.xpose.msra.mxu0 0
        %1032 = vmatprep.subr.bf16.mxu0 0
        %1033 = vmatpush2.bf16.xpose.msra.mxu0 0
        %1034 = vmatprep.subr.bf16.mxu0 0
        %1035 = vmatpush2.bf16.xpose.msra.mxu0 0
        %1036 = vmatprep.subr.bf16.mxu0 0
        %1037 = vmatpush2.bf16.xpose.msra.mxu0 0
        %1038 = vmatprep.subr.bf16.mxu0 0
        %1039 = vmatpush2.bf16.xpose.msra.mxu0 0
        %1040 = vmatprep.mubr.bf16.mxu0 0
        %1041 = vmatmul.mubr.bf16.gmra.mxu0 %v1003
        %v1042 = vpop.f32.mrf.mxu0
        %v1043 = vadd.f32 0.0, %v1042
        %v1044 = vpop.f32.mrf.mxu0
        %v1045 = vpop.f32.mrf.mxu0
        %v1046 = vpop.f32.mrf.mxu0
        %1047 = vdwg.mxu0
        %v1048 = vsel %vm947, 1, 0
        %v1049 = vsel %vm948, 1, 0
        %v1050 = vlaneseq
        %v1051 = vshrl.u32 %v1050, 7
        %v1052 = vsub.s32 0, %v1051
        %v1053 = vrot.slane %v1048, %v1052
        %v1054 = vlaneseq
        %v1055 = vshrl.u32 %v1054, 7
        %v1056 = vsub.s32 0, %v1055
        %v1057 = vrot.slane %v1049, %v1056
        %vm1058 = vcmp.eq.s32.totalorder %v1053, 1
        %vm1059 = vcmp.eq.s32.totalorder %v1057, 1
        %v1060 = vsel %vm1058, %v994, -1e+09
        %v1061 = vsel %vm1059, %v1043, -1e+09
        %v1062 = vsel %vm952, %v1060, -inf
        %1063 = vmax.xlane.f32.xlu0 %v1062
        %v1064 = vpop.xlane.xlu0 %1063
        %v1065 = vsel %vm952, %v1061, -inf
        %1066 = vmax.xlane.f32.xlu0 %v1065
        %v1067 = vpop.xlane.xlu0 %1066
        %v1068 = vsub.f32 %v1060, %v1064
        %v1069 = vsub.f32 %v1061, %v1067
        %v1070 = vmul.f32 %v1068, 1.442695
        %v1071 = vpow.pop %v1070
        %v1072 = vmul.f32 %v1069, 1.442695
        %v1073 = vpow.pop %v1072
        %v1074 = vsel %vm952, %v1071, 0.0
        %1075 = vadd.xlane.f32.xlu0 %v1074
        %v1076 = vpop.xlane.xlu0 %1075
        %v1077 = vsel %vm952, %v1073, 0.0
        %1078 = vadd.xlane.f32.xlu0 %v1077
        %v1079 = vpop.xlane.xlu0 %1078
        %v1080 = vrcp.pop %v1076
        %v1081 = vrcp.pop %v1079
        %v1082 = vmul.f32 %v1071, %v1080
        %v1083 = vmul.f32 %v1073, %v1081
        %v1084 = vpack.c.bf16 %v1082, %v1082
        %v1085 = vpack.c.bf16 %v1083, %v1083
        %1086 = vrot.lane.b32.xlu0 %v943, 64
        %v1087 = vpop.permute.xlu0 %1086
        %v1089 = vsel %vm952, %v1084, 0
        %vm1091 = vcmask 1043456
        %v1093 = vsel %vm1091, %v1087, 0
        %1095 = vmatprep.subr.bf16.mxu0 0
        %1096 = vmatpush1.bf16.msra.mxu0 0
        %1097 = vmatprep.subr.bf16.mxu0 0
        %1098 = vmatpush1.bf16.msra.mxu0 0
        %1099 = vmatprep.subr.bf16.mxu0 0
        %1100 = vmatpush1.bf16.msra.mxu0 0
        %1101 = vmatprep.subr.bf16.mxu0 0
        %1102 = vmatpush1.bf16.msra.mxu0 0
        %1103 = vmatprep.subr.bf16.mxu0 0
        %1104 = vmatpush1.bf16.msra.mxu0 0
        %1105 = vmatprep.subr.bf16.mxu0 0
        %1106 = vmatpush1.bf16.msra.mxu0 0
        %1107 = vmatprep.subr.bf16.mxu0 0
        %1108 = vmatpush1.bf16.msra.mxu0 0
        %1109 = vmatprep.subr.bf16.mxu0 0
        %1110 = vmatpush1.bf16.msra.mxu0 %v1093
        %1111 = vmatprep.subr.bf16.mxu0 0
        %1112 = vmatpush2.bf16.msra.mxu0 0
        %1113 = vmatprep.subr.bf16.mxu0 0
        %1114 = vmatpush2.bf16.msra.mxu0 0
        %1115 = vmatprep.subr.bf16.mxu0 0
        %1116 = vmatpush2.bf16.msra.mxu0 0
        %1117 = vmatprep.subr.bf16.mxu0 0
        %1118 = vmatpush2.bf16.msra.mxu0 0
        %1119 = vmatprep.subr.bf16.mxu0 0
        %1120 = vmatpush2.bf16.msra.mxu0 0
        %1121 = vmatprep.subr.bf16.mxu0 0
        %1122 = vmatpush2.bf16.msra.mxu0 0
        %1123 = vmatprep.subr.bf16.mxu0 0
        %1124 = vmatpush2.bf16.msra.mxu0 0
        %1125 = vmatprep.subr.bf16.mxu0 0
        %1126 = vmatpush2.bf16.msra.mxu0 0
        %1127 = vmatprep.mubr.bf16.mxu0 0
        %1128 = vmatmul.mubr.bf16.gmra.mxu0 %v1089
        %v1129 = vpop.f32.mrf.mxu0
        %v1130 = vadd.f32 0.0, %v1129
        %v1131 = vpop.f32.mrf.mxu0
        %v1132 = vpop.f32.mrf.mxu0
        %v1133 = vpop.f32.mrf.mxu0
        %1134 = vdwg.mxu0
        %1135 = vrot.lane.b32.xlu0 %v944, 64
        %v1136 = vpop.permute.xlu0 %1135
        %v1138 = vsel %vm952, %v1085, 0
        %v1141 = vsel %vm1091, %v1136, 0
        %1143 = vmatprep.subr.bf16.mxu0 0
        %1144 = vmatpush1.bf16.msra.mxu0 0
        %1145 = vmatprep.subr.bf16.mxu0 0
        %1146 = vmatpush1.bf16.msra.mxu0 0
        %1147 = vmatprep.subr.bf16.mxu0 0
        %1148 = vmatpush1.bf16.msra.mxu0 0
        %1149 = vmatprep.subr.bf16.mxu0 0
        %1150 = vmatpush1.bf16.msra.mxu0 0
        %1151 = vmatprep.subr.bf16.mxu0 0
        %1152 = vmatpush1.bf16.msra.mxu0 0
        %1153 = vmatprep.subr.bf16.mxu0 0
        %1154 = vmatpush1.bf16.msra.mxu0 0
        %1155 = vmatprep.subr.bf16.mxu0 0
        %1156 = vmatpush1.bf16.msra.mxu0 0
        %1157 = vmatprep.subr.bf16.mxu0 0
        %1158 = vmatpush1.bf16.msra.mxu0 %v1141
        %1159 = vmatprep.subr.bf16.mxu0 0
        %1160 = vmatpush2.bf16.msra.mxu0 0
        %1161 = vmatprep.subr.bf16.mxu0 0
        %1162 = vmatpush2.bf16.msra.mxu0 0
        %1163 = vmatprep.subr.bf16.mxu0 0
        %1164 = vmatpush2.bf16.msra.mxu0 0
        %1165 = vmatprep.subr.bf16.mxu0 0
        %1166 = vmatpush2.bf16.msra.mxu0 0
        %1167 = vmatprep.subr.bf16.mxu0 0
        %1168 = vmatpush2.bf16.msra.mxu0 0
        %1169 = vmatprep.subr.bf16.mxu0 0
        %1170 = vmatpush2.bf16.msra.mxu0 0
        %1171 = vmatprep.subr.bf16.mxu0 0
        %1172 = vmatpush2.bf16.msra.mxu0 0
        %1173 = vmatprep.subr.bf16.mxu0 0
        %1174 = vmatpush2.bf16.msra.mxu0 0
        %1175 = vmatprep.mubr.bf16.mxu0 0
        %1176 = vmatmul.mubr.bf16.gmra.mxu0 %v1138
        %v1177 = vpop.f32.mrf.mxu0
        %v1178 = vadd.f32 0.0, %v1177
        %v1179 = vpop.f32.mrf.mxu0
        %v1180 = vpop.f32.mrf.mxu0
        %v1181 = vpop.f32.mrf.mxu0
        %1182 = vdwg.mxu0
        %1184 = vrot.lane.b32.xlu0 %v941, 120
        %v1185 = vpop.permute.xlu0 %1184
        %1186 = vrot.lane.b32.xlu0 %v943, 88
        %v1187 = vpop.permute.xlu0 %1186
        %v1189 = vsel %vm952, %v1185, 0
        %v1192 = vsel %vm952, %v1187, 0
        %1194 = vmatprep.subr.bf16.mxu0 0
        %1195 = vmatpush1.bf16.xpose.msra.mxu0 0
        %1196 = vmatprep.subr.bf16.mxu0 0
        %1197 = vmatpush1.bf16.xpose.msra.mxu0 0
        %1198 = vmatprep.subr.bf16.mxu0 0
        %1199 = vmatpush1.bf16.xpose.msra.mxu0 0
        %1200 = vmatprep.subr.bf16.mxu0 0
        %1201 = vmatpush1.bf16.xpose.msra.mxu0 0
        %1202 = vmatprep.subr.bf16.mxu0 0
        %1203 = vmatpush1.bf16.xpose.msra.mxu0 0
        %1204 = vmatprep.subr.bf16.mxu0 0
        %1205 = vmatpush1.bf16.xpose.msra.mxu0 0
        %1206 = vmatprep.subr.bf16.mxu0 0
        %1207 = vmatpush1.bf16.xpose.msra.mxu0 0
        %1208 = vmatprep.subr.bf16.mxu0 0
        %1209 = vmatpush1.bf16.xpose.msra.mxu0 %v1192
        %1210 = vmatprep.subr.bf16.mxu0 0
        %1211 = vmatpush2.bf16.xpose.msra.mxu0 0
        %1212 = vmatprep.subr.bf16.mxu0 0
        %1213 = vmatpush2.bf16.xpose.msra.mxu0 0
        %1214 = vmatprep.subr.bf16.mxu0 0
        %1215 = vmatpush2.bf16.xpose.msra.mxu0 0
        %1216 = vmatprep.subr.bf16.mxu0 0
        %1217 = vmatpush2.bf16.xpose.msra.mxu0 0
        %1218 = vmatprep.subr.bf16.mxu0 0
        %1219 = vmatpush2.bf16.xpose.msra.mxu0 0
        %1220 = vmatprep.subr.bf16.mxu0 0
        %1221 = vmatpush2.bf16.xpose.msra.mxu0 0
        %1222 = vmatprep.subr.bf16.mxu0 0
        %1223 = vmatpush2.bf16.xpose.msra.mxu0 0
        %1224 = vmatprep.subr.bf16.mxu0 0
        %1225 = vmatpush2.bf16.xpose.msra.mxu0 0
        %1226 = vmatprep.mubr.bf16.mxu0 0
        %1227 = vmatmul.mubr.bf16.gmra.mxu0 %v1189
        %v1228 = vpop.f32.mrf.mxu0
        %v1229 = vadd.f32 0.0, %v1228
        %v1230 = vpop.f32.mrf.mxu0
        %v1231 = vpop.f32.mrf.mxu0
        %v1232 = vpop.f32.mrf.mxu0
        %1233 = vdwg.mxu0
        %1235 = vrot.lane.b32.xlu0 %v942, 120
        %v1236 = vpop.permute.xlu0 %1235
        %1237 = vrot.lane.b32.xlu0 %v944, 88
        %v1238 = vpop.permute.xlu0 %1237
        %v1240 = vsel %vm952, %v1236, 0
        %v1243 = vsel %vm952, %v1238, 0
        %1245 = vmatprep.subr.bf16.mxu0 0
        %1246 = vmatpush1.bf16.xpose.msra.mxu0 0
        %1247 = vmatprep.subr.bf16.mxu0 0
        %1248 = vmatpush1.bf16.xpose.msra.mxu0 0
        %1249 = vmatprep.subr.bf16.mxu0 0
        %1250 = vmatpush1.bf16.xpose.msra.mxu0 0
        %1251 = vmatprep.subr.bf16.mxu0 0
        %1252 = vmatpush1.bf16.xpose.msra.mxu0 0
        %1253 = vmatprep.subr.bf16.mxu0 0
        %1254 = vmatpush1.bf16.xpose.msra.mxu0 0
        %1255 = vmatprep.subr.bf16.mxu0 0
        %1256 = vmatpush1.bf16.xpose.msra.mxu0 0
        %1257 = vmatprep.subr.bf16.mxu0 0
        %1258 = vmatpush1.bf16.xpose.msra.mxu0 0
        %1259 = vmatprep.subr.bf16.mxu0 0
        %1260 = vmatpush1.bf16.xpose.msra.mxu0 %v1243
        %1261 = vmatprep.subr.bf16.mxu0 0
        %1262 = vmatpush2.bf16.xpose.msra.mxu0 0
        %1263 = vmatprep.subr.bf16.mxu0 0
        %1264 = vmatpush2.bf16.xpose.msra.mxu0 0
        %1265 = vmatprep.subr.bf16.mxu0 0
        %1266 = vmatpush2.bf16.xpose.msra.mxu0 0
        %1267 = vmatprep.subr.bf16.mxu0 0
        %1268 = vmatpush2.bf16.xpose.msra.mxu0 0
        %1269 = vmatprep.subr.bf16.mxu0 0
        %1270 = vmatpush2.bf16.xpose.msra.mxu0 0
        %1271 = vmatprep.subr.bf16.mxu0 0
        %1272 = vmatpush2.bf16.xpose.msra.mxu0 0
        %1273 = vmatprep.subr.bf16.mxu0 0
        %1274 = vmatpush2.bf16.xpose.msra.mxu0 0
        %1275 = vmatprep.subr.bf16.mxu0 0
        %1276 = vmatpush2.bf16.xpose.msra.mxu0 0
        %1277 = vmatprep.mubr.bf16.mxu0 0
        %1278 = vmatmul.mubr.bf16.gmra.mxu0 %v1240
        %v1279 = vpop.f32.mrf.mxu0
        %v1280 = vadd.f32 0.0, %v1279
        %v1281 = vpop.f32.mrf.mxu0
        %v1282 = vpop.f32.mrf.mxu0
        %v1283 = vpop.f32.mrf.mxu0
        %1284 = vdwg.mxu0
        %v1285 = vsel %vm1058, %v1229, -1e+09
        %v1286 = vsel %vm1059, %v1280, -1e+09
        %v1287 = vsel %vm952, %v1285, -inf
        %1288 = vmax.xlane.f32.xlu0 %v1287
        %v1289 = vpop.xlane.xlu0 %1288
        %v1290 = vsel %vm952, %v1286, -inf
        %1291 = vmax.xlane.f32.xlu0 %v1290
        %v1292 = vpop.xlane.xlu0 %1291
        %v1293 = vsub.f32 %v1285, %v1289
        %v1294 = vsub.f32 %v1286, %v1292
        %v1295 = vmul.f32 %v1293, 1.442695
        %v1296 = vpow.pop %v1295
        %v1297 = vmul.f32 %v1294, 1.442695
        %v1298 = vpow.pop %v1297
        %v1299 = vsel %vm952, %v1296, 0.0
        %1300 = vadd.xlane.f32.xlu0 %v1299
        %v1301 = vpop.xlane.xlu0 %1300
        %v1302 = vsel %vm952, %v1298, 0.0
        %1303 = vadd.xlane.f32.xlu0 %v1302
        %v1304 = vpop.xlane.xlu0 %1303
        %v1305 = vrcp.pop %v1301
        %v1306 = vrcp.pop %v1304
        %v1307 = vmul.f32 %v1296, %v1305
        %v1308 = vmul.f32 %v1298, %v1306
        %v1309 = vpack.c.bf16 %v1307, %v1307
        %v1310 = vpack.c.bf16 %v1308, %v1308
        %1311 = vrot.lane.b32.xlu0 %v943, 56
        %v1312 = vpop.permute.xlu0 %1311
        %v1314 = vsel %vm952, %v1309, 0
        %v1317 = vsel %vm1091, %v1312, 0
        %1319 = vmatprep.subr.bf16.mxu0 0
        %1320 = vmatpush1.bf16.msra.mxu0 0
        %1321 = vmatprep.subr.bf16.mxu0 0
        %1322 = vmatpush1.bf16.msra.mxu0 0
        %1323 = vmatprep.subr.bf16.mxu0 0
        %1324 = vmatpush1.bf16.msra.mxu0 0
        %1325 = vmatprep.subr.bf16.mxu0 0
        %1326 = vmatpush1.bf16.msra.mxu0 0
        %1327 = vmatprep.subr.bf16.mxu0 0
        %1328 = vmatpush1.bf16.msra.mxu0 0
        %1329 = vmatprep.subr.bf16.mxu0 0
        %1330 = vmatpush1.bf16.msra.mxu0 0
        %1331 = vmatprep.subr.bf16.mxu0 0
        %1332 = vmatpush1.bf16.msra.mxu0 0
        %1333 = vmatprep.subr.bf16.mxu0 0
        %1334 = vmatpush1.bf16.msra.mxu0 %v1317
        %1335 = vmatprep.subr.bf16.mxu0 0
        %1336 = vmatpush2.bf16.msra.mxu0 0
        %1337 = vmatprep.subr.bf16.mxu0 0
        %1338 = vmatpush2.bf16.msra.mxu0 0
        %1339 = vmatprep.subr.bf16.mxu0 0
        %1340 = vmatpush2.bf16.msra.mxu0 0
        %1341 = vmatprep.subr.bf16.mxu0 0
        %1342 = vmatpush2.bf16.msra.mxu0 0
        %1343 = vmatprep.subr.bf16.mxu0 0
        %1344 = vmatpush2.bf16.msra.mxu0 0
        %1345 = vmatprep.subr.bf16.mxu0 0
        %1346 = vmatpush2.bf16.msra.mxu0 0
        %1347 = vmatprep.subr.bf16.mxu0 0
        %1348 = vmatpush2.bf16.msra.mxu0 0
        %1349 = vmatprep.subr.bf16.mxu0 0
        %1350 = vmatpush2.bf16.msra.mxu0 0
        %1351 = vmatprep.mubr.bf16.mxu0 0
        %1352 = vmatmul.mubr.bf16.gmra.mxu0 %v1314
        %v1353 = vpop.f32.mrf.mxu0
        %v1354 = vadd.f32 0.0, %v1353
        %v1355 = vpop.f32.mrf.mxu0
        %v1356 = vpop.f32.mrf.mxu0
        %v1357 = vpop.f32.mrf.mxu0
        %1358 = vdwg.mxu0
        %1359 = vrot.lane.b32.xlu0 %v944, 56
        %v1360 = vpop.permute.xlu0 %1359
        %v1362 = vsel %vm952, %v1310, 0
        %v1365 = vsel %vm1091, %v1360, 0
        %1367 = vmatprep.subr.bf16.mxu0 0
        %1368 = vmatpush1.bf16.msra.mxu0 0
        %1369 = vmatprep.subr.bf16.mxu0 0
        %1370 = vmatpush1.bf16.msra.mxu0 0
        %1371 = vmatprep.subr.bf16.mxu0 0
        %1372 = vmatpush1.bf16.msra.mxu0 0
        %1373 = vmatprep.subr.bf16.mxu0 0
        %1374 = vmatpush1.bf16.msra.mxu0 0
        %1375 = vmatprep.subr.bf16.mxu0 0
        %1376 = vmatpush1.bf16.msra.mxu0 0
        %1377 = vmatprep.subr.bf16.mxu0 0
        %1378 = vmatpush1.bf16.msra.mxu0 0
        %1379 = vmatprep.subr.bf16.mxu0 0
        %1380 = vmatpush1.bf16.msra.mxu0 0
        %1381 = vmatprep.subr.bf16.mxu0 0
        %1382 = vmatpush1.bf16.msra.mxu0 %v1365
        %1383 = vmatprep.subr.bf16.mxu0 0
        %1384 = vmatpush2.bf16.msra.mxu0 0
        %1385 = vmatprep.subr.bf16.mxu0 0
        %1386 = vmatpush2.bf16.msra.mxu0 0
        %1387 = vmatprep.subr.bf16.mxu0 0
        %1388 = vmatpush2.bf16.msra.mxu0 0
        %1389 = vmatprep.subr.bf16.mxu0 0
        %1390 = vmatpush2.bf16.msra.mxu0 0
        %1391 = vmatprep.subr.bf16.mxu0 0
        %1392 = vmatpush2.bf16.msra.mxu0 0
        %1393 = vmatprep.subr.bf16.mxu0 0
        %1394 = vmatpush2.bf16.msra.mxu0 0
        %1395 = vmatprep.subr.bf16.mxu0 0
        %1396 = vmatpush2.bf16.msra.mxu0 0
        %1397 = vmatprep.subr.bf16.mxu0 0
        %1398 = vmatpush2.bf16.msra.mxu0 0
        %1399 = vmatprep.mubr.bf16.mxu0 0
        %1400 = vmatmul.mubr.bf16.gmra.mxu0 %v1362
        %v1401 = vpop.f32.mrf.mxu0
        %v1402 = vadd.f32 0.0, %v1401
        %v1403 = vpop.f32.mrf.mxu0
        %v1404 = vpop.f32.mrf.mxu0
        %v1405 = vpop.f32.mrf.mxu0
        %1406 = vdwg.mxu0
        %1407 = vrot.lane.b32.xlu0 %v941, 112
        %v1408 = vpop.permute.xlu0 %1407
        %1409 = vrot.lane.b32.xlu0 %v943, 80
        %v1410 = vpop.permute.xlu0 %1409
        %v1412 = vsel %vm952, %v1408, 0
        %v1415 = vsel %vm952, %v1410, 0
        %1417 = vmatprep.subr.bf16.mxu0 0
        %1418 = vmatpush1.bf16.xpose.msra.mxu0 0
        %1419 = vmatprep.subr.bf16.mxu0 0
        %1420 = vmatpush1.bf16.xpose.msra.mxu0 0
        %1421 = vmatprep.subr.bf16.mxu0 0
        %1422 = vmatpush1.bf16.xpose.msra.mxu0 0
        %1423 = vmatprep.subr.bf16.mxu0 0
        %1424 = vmatpush1.bf16.xpose.msra.mxu0 0
        %1425 = vmatprep.subr.bf16.mxu0 0
        %1426 = vmatpush1.bf16.xpose.msra.mxu0 0
        %1427 = vmatprep.subr.bf16.mxu0 0
        %1428 = vmatpush1.bf16.xpose.msra.mxu0 0
        %1429 = vmatprep.subr.bf16.mxu0 0
        %1430 = vmatpush1.bf16.xpose.msra.mxu0 0
        %1431 = vmatprep.subr.bf16.mxu0 0
        %1432 = vmatpush1.bf16.xpose.msra.mxu0 %v1415
        %1433 = vmatprep.subr.bf16.mxu0 0
        %1434 = vmatpush2.bf16.xpose.msra.mxu0 0
        %1435 = vmatprep.subr.bf16.mxu0 0
        %1436 = vmatpush2.bf16.xpose.msra.mxu0 0
        %1437 = vmatprep.subr.bf16.mxu0 0
        %1438 = vmatpush2.bf16.xpose.msra.mxu0 0
        %1439 = vmatprep.subr.bf16.mxu0 0
        %1440 = vmatpush2.bf16.xpose.msra.mxu0 0
        %1441 = vmatprep.subr.bf16.mxu0 0
        %1442 = vmatpush2.bf16.xpose.msra.mxu0 0
        %1443 = vmatprep.subr.bf16.mxu0 0
        %1444 = vmatpush2.bf16.xpose.msra.mxu0 0
        %1445 = vmatprep.subr.bf16.mxu0 0
        %1446 = vmatpush2.bf16.xpose.msra.mxu0 0
        %1447 = vmatprep.subr.bf16.mxu0 0
        %1448 = vmatpush2.bf16.xpose.msra.mxu0 0
        %1449 = vmatprep.mubr.bf16.mxu0 0
        %1450 = vmatmul.mubr.bf16.gmra.mxu0 %v1412
        %v1451 = vpop.f32.mrf.mxu0
        %v1452 = vadd.f32 0.0, %v1451
        %v1453 = vpop.f32.mrf.mxu0
        %v1454 = vpop.f32.mrf.mxu0
        %v1455 = vpop.f32.mrf.mxu0
        %1456 = vdwg.mxu0
        %1457 = vrot.lane.b32.xlu0 %v942, 112
        %v1458 = vpop.permute.xlu0 %1457
        %1459 = vrot.lane.b32.xlu0 %v944, 80
        %v1460 = vpop.permute.xlu0 %1459
        %v1462 = vsel %vm952, %v1458, 0
        %v1465 = vsel %vm952, %v1460, 0
        %1467 = vmatprep.subr.bf16.mxu0 0
        %1468 = vmatpush1.bf16.xpose.msra.mxu0 0
        %1469 = vmatprep.subr.bf16.mxu0 0
        %1470 = vmatpush1.bf16.xpose.msra.mxu0 0
        %1471 = vmatprep.subr.bf16.mxu0 0
        %1472 = vmatpush1.bf16.xpose.msra.mxu0 0
        %1473 = vmatprep.subr.bf16.mxu0 0
        %1474 = vmatpush1.bf16.xpose.msra.mxu0 0
        %1475 = vmatprep.subr.bf16.mxu0 0
        %1476 = vmatpush1.bf16.xpose.msra.mxu0 0
        %1477 = vmatprep.subr.bf16.mxu0 0
        %1478 = vmatpush1.bf16.xpose.msra.mxu0 0
        %1479 = vmatprep.subr.bf16.mxu0 0
        %1480 = vmatpush1.bf16.xpose.msra.mxu0 0
        %1481 = vmatprep.subr.bf16.mxu0 0
        %1482 = vmatpush1.bf16.xpose.msra.mxu0 %v1465
        %1483 = vmatprep.subr.bf16.mxu0 0
        %1484 = vmatpush2.bf16.xpose.msra.mxu0 0
        %1485 = vmatprep.subr.bf16.mxu0 0
        %1486 = vmatpush2.bf16.xpose.msra.mxu0 0
        %1487 = vmatprep.subr.bf16.mxu0 0
        %1488 = vmatpush2.bf16.xpose.msra.mxu0 0
        %1489 = vmatprep.subr.bf16.mxu0 0
        %1490 = vmatpush2.bf16.xpose.msra.mxu0 0
        %1491 = vmatprep.subr.bf16.mxu0 0
        %1492 = vmatpush2.bf16.xpose.msra.mxu0 0
        %1493 = vmatprep.subr.bf16.mxu0 0
        %1494 = vmatpush2.bf16.xpose.msra.mxu0 0
        %1495 = vmatprep.subr.bf16.mxu0 0
        %1496 = vmatpush2.bf16.xpose.msra.mxu0 0
        %1497 = vmatprep.subr.bf16.mxu0 0
        %1498 = vmatpush2.bf16.xpose.msra.mxu0 0
        %1499 = vmatprep.mubr.bf16.mxu0 0
        %1500 = vmatmul.mubr.bf16.gmra.mxu0 %v1462
        %v1501 = vpop.f32.mrf.mxu0
        %v1502 = vadd.f32 0.0, %v1501
        %v1503 = vpop.f32.mrf.mxu0
        %v1504 = vpop.f32.mrf.mxu0
        %v1505 = vpop.f32.mrf.mxu0
        %1506 = vdwg.mxu0
        %v1507 = vsel %vm1058, %v1452, -1e+09
        %v1508 = vsel %vm1059, %v1502, -1e+09
        %v1509 = vsel %vm952, %v1507, -inf
        %1510 = vmax.xlane.f32.xlu0 %v1509
        %v1511 = vpop.xlane.xlu0 %1510
        %v1512 = vsel %vm952, %v1508, -inf
        %1513 = vmax.xlane.f32.xlu0 %v1512
        %v1514 = vpop.xlane.xlu0 %1513
        %v1515 = vsub.f32 %v1507, %v1511
        %v1516 = vsub.f32 %v1508, %v1514
        %v1517 = vmul.f32 %v1515, 1.442695
        %v1518 = vpow.pop %v1517
        %v1519 = vmul.f32 %v1516, 1.442695
        %v1520 = vpow.pop %v1519
        %v1521 = vsel %vm952, %v1518, 0.0
        %1522 = vadd.xlane.f32.xlu0 %v1521
        %v1523 = vpop.xlane.xlu0 %1522
        %v1524 = vsel %vm952, %v1520, 0.0
        %1525 = vadd.xlane.f32.xlu0 %v1524
        %v1526 = vpop.xlane.xlu0 %1525
        %v1527 = vrcp.pop %v1523
        %v1528 = vrcp.pop %v1526
        %v1529 = vmul.f32 %v1518, %v1527
        %v1530 = vmul.f32 %v1520, %v1528
        %v1531 = vpack.c.bf16 %v1529, %v1529
        %v1532 = vpack.c.bf16 %v1530, %v1530
        %1533 = vrot.lane.b32.xlu0 %v943, 48
        %v1534 = vpop.permute.xlu0 %1533
        %v1536 = vsel %vm952, %v1531, 0
        %v1539 = vsel %vm1091, %v1534, 0
        %1541 = vmatprep.subr.bf16.mxu0 0
        %1542 = vmatpush1.bf16.msra.mxu0 0
        %1543 = vmatprep.subr.bf16.mxu0 0
        %1544 = vmatpush1.bf16.msra.mxu0 0
        %1545 = vmatprep.subr.bf16.mxu0 0
        %1546 = vmatpush1.bf16.msra.mxu0 0
        %1547 = vmatprep.subr.bf16.mxu0 0
        %1548 = vmatpush1.bf16.msra.mxu0 0
        %1549 = vmatprep.subr.bf16.mxu0 0
        %1550 = vmatpush1.bf16.msra.mxu0 0
        %1551 = vmatprep.subr.bf16.mxu0 0
        %1552 = vmatpush1.bf16.msra.mxu0 0
        %1553 = vmatprep.subr.bf16.mxu0 0
        %1554 = vmatpush1.bf16.msra.mxu0 0
        %1555 = vmatprep.subr.bf16.mxu0 0
        %1556 = vmatpush1.bf16.msra.mxu0 %v1539
        %1557 = vmatprep.subr.bf16.mxu0 0
        %1558 = vmatpush2.bf16.msra.mxu0 0
        %1559 = vmatprep.subr.bf16.mxu0 0
        %1560 = vmatpush2.bf16.msra.mxu0 0
        %1561 = vmatprep.subr.bf16.mxu0 0
        %1562 = vmatpush2.bf16.msra.mxu0 0
        %1563 = vmatprep.subr.bf16.mxu0 0
        %1564 = vmatpush2.bf16.msra.mxu0 0
        %1565 = vmatprep.subr.bf16.mxu0 0
        %1566 = vmatpush2.bf16.msra.mxu0 0
        %1567 = vmatprep.subr.bf16.mxu0 0
        %1568 = vmatpush2.bf16.msra.mxu0 0
        %1569 = vmatprep.subr.bf16.mxu0 0
        %1570 = vmatpush2.bf16.msra.mxu0 0
        %1571 = vmatprep.subr.bf16.mxu0 0
        %1572 = vmatpush2.bf16.msra.mxu0 0
        %1573 = vmatprep.mubr.bf16.mxu0 0
        %1574 = vmatmul.mubr.bf16.gmra.mxu0 %v1536
        %v1575 = vpop.f32.mrf.mxu0
        %v1576 = vadd.f32 0.0, %v1575
        %v1577 = vpop.f32.mrf.mxu0
        %v1578 = vpop.f32.mrf.mxu0
        %v1579 = vpop.f32.mrf.mxu0
        %1580 = vdwg.mxu0
        %1581 = vrot.lane.b32.xlu0 %v944, 48
        %v1582 = vpop.permute.xlu0 %1581
        %v1584 = vsel %vm952, %v1532, 0
        %v1587 = vsel %vm1091, %v1582, 0
        %1589 = vmatprep.subr.bf16.mxu0 0
        %1590 = vmatpush1.bf16.msra.mxu0 0
        %1591 = vmatprep.subr.bf16.mxu0 0
        %1592 = vmatpush1.bf16.msra.mxu0 0
        %1593 = vmatprep.subr.bf16.mxu0 0
        %1594 = vmatpush1.bf16.msra.mxu0 0
        %1595 = vmatprep.subr.bf16.mxu0 0
        %1596 = vmatpush1.bf16.msra.mxu0 0
        %1597 = vmatprep.subr.bf16.mxu0 0
        %1598 = vmatpush1.bf16.msra.mxu0 0
        %1599 = vmatprep.subr.bf16.mxu0 0
        %1600 = vmatpush1.bf16.msra.mxu0 0
        %1601 = vmatprep.subr.bf16.mxu0 0
        %1602 = vmatpush1.bf16.msra.mxu0 0
        %1603 = vmatprep.subr.bf16.mxu0 0
        %1604 = vmatpush1.bf16.msra.mxu0 %v1587
        %1605 = vmatprep.subr.bf16.mxu0 0
        %1606 = vmatpush2.bf16.msra.mxu0 0
        %1607 = vmatprep.subr.bf16.mxu0 0
        %1608 = vmatpush2.bf16.msra.mxu0 0
        %1609 = vmatprep.subr.bf16.mxu0 0
        %1610 = vmatpush2.bf16.msra.mxu0 0
        %1611 = vmatprep.subr.bf16.mxu0 0
        %1612 = vmatpush2.bf16.msra.mxu0 0
        %1613 = vmatprep.subr.bf16.mxu0 0
        %1614 = vmatpush2.bf16.msra.mxu0 0
        %1615 = vmatprep.subr.bf16.mxu0 0
        %1616 = vmatpush2.bf16.msra.mxu0 0
        %1617 = vmatprep.subr.bf16.mxu0 0
        %1618 = vmatpush2.bf16.msra.mxu0 0
        %1619 = vmatprep.subr.bf16.mxu0 0
        %1620 = vmatpush2.bf16.msra.mxu0 0
        %1621 = vmatprep.mubr.bf16.mxu0 0
        %1622 = vmatmul.mubr.bf16.gmra.mxu0 %v1584
        %v1623 = vpop.f32.mrf.mxu0
        %v1624 = vadd.f32 0.0, %v1623
        %v1625 = vpop.f32.mrf.mxu0
        %v1626 = vpop.f32.mrf.mxu0
        %v1627 = vpop.f32.mrf.mxu0
        %1628 = vdwg.mxu0
        %1629 = vrot.lane.b32.xlu0 %v941, 104
        %v1630 = vpop.permute.xlu0 %1629
        %1631 = vrot.lane.b32.xlu0 %v943, 72
        %v1632 = vpop.permute.xlu0 %1631
        %v1634 = vsel %vm952, %v1630, 0
        %v1637 = vsel %vm952, %v1632, 0
        %1639 = vmatprep.subr.bf16.mxu0 0
        %1640 = vmatpush1.bf16.xpose.msra.mxu0 0
        %1641 = vmatprep.subr.bf16.mxu0 0
        %1642 = vmatpush1.bf16.xpose.msra.mxu0 0
        %1643 = vmatprep.subr.bf16.mxu0 0
        %1644 = vmatpush1.bf16.xpose.msra.mxu0 0
        %1645 = vmatprep.subr.bf16.mxu0 0
        %1646 = vmatpush1.bf16.xpose.msra.mxu0 0
        %1647 = vmatprep.subr.bf16.mxu0 0
        %1648 = vmatpush1.bf16.xpose.msra.mxu0 0
        %1649 = vmatprep.subr.bf16.mxu0 0
        %1650 = vmatpush1.bf16.xpose.msra.mxu0 0
        %1651 = vmatprep.subr.bf16.mxu0 0
        %1652 = vmatpush1.bf16.xpose.msra.mxu0 0
        %1653 = vmatprep.subr.bf16.mxu0 0
        %1654 = vmatpush1.bf16.xpose.msra.mxu0 %v1637
        %1655 = vmatprep.subr.bf16.mxu0 0
        %1656 = vmatpush2.bf16.xpose.msra.mxu0 0
        %1657 = vmatprep.subr.bf16.mxu0 0
        %1658 = vmatpush2.bf16.xpose.msra.mxu0 0
        %1659 = vmatprep.subr.bf16.mxu0 0
        %1660 = vmatpush2.bf16.xpose.msra.mxu0 0
        %1661 = vmatprep.subr.bf16.mxu0 0
        %1662 = vmatpush2.bf16.xpose.msra.mxu0 0
        %1663 = vmatprep.subr.bf16.mxu0 0
        %1664 = vmatpush2.bf16.xpose.msra.mxu0 0
        %1665 = vmatprep.subr.bf16.mxu0 0
        %1666 = vmatpush2.bf16.xpose.msra.mxu0 0
        %1667 = vmatprep.subr.bf16.mxu0 0
        %1668 = vmatpush2.bf16.xpose.msra.mxu0 0
        %1669 = vmatprep.subr.bf16.mxu0 0
        %1670 = vmatpush2.bf16.xpose.msra.mxu0 0
        %1671 = vmatprep.mubr.bf16.mxu0 0
        %1672 = vmatmul.mubr.bf16.gmra.mxu0 %v1634
        %v1673 = vpop.f32.mrf.mxu0
        %v1674 = vadd.f32 0.0, %v1673
        %v1675 = vpop.f32.mrf.mxu0
        %v1676 = vpop.f32.mrf.mxu0
        %v1677 = vpop.f32.mrf.mxu0
        %1678 = vdwg.mxu0
        %1679 = vrot.lane.b32.xlu0 %v942, 104
        %v1680 = vpop.permute.xlu0 %1679
        %1681 = vrot.lane.b32.xlu0 %v944, 72
        %v1682 = vpop.permute.xlu0 %1681
        %v1684 = vsel %vm952, %v1680, 0
        %v1687 = vsel %vm952, %v1682, 0
        %1689 = vmatprep.subr.bf16.mxu0 0
        %1690 = vmatpush1.bf16.xpose.msra.mxu0 0
        %1691 = vmatprep.subr.bf16.mxu0 0
        %1692 = vmatpush1.bf16.xpose.msra.mxu0 0
        %1693 = vmatprep.subr.bf16.mxu0 0
        %1694 = vmatpush1.bf16.xpose.msra.mxu0 0
        %1695 = vmatprep.subr.bf16.mxu0 0
        %1696 = vmatpush1.bf16.xpose.msra.mxu0 0
        %1697 = vmatprep.subr.bf16.mxu0 0
        %1698 = vmatpush1.bf16.xpose.msra.mxu0 0
        %1699 = vmatprep.subr.bf16.mxu0 0
        %1700 = vmatpush1.bf16.xpose.msra.mxu0 0
        %1701 = vmatprep.subr.bf16.mxu0 0
        %1702 = vmatpush1.bf16.xpose.msra.mxu0 0
        %1703 = vmatprep.subr.bf16.mxu0 0
        %1704 = vmatpush1.bf16.xpose.msra.mxu0 %v1687
        %1705 = vmatprep.subr.bf16.mxu0 0
        %1706 = vmatpush2.bf16.xpose.msra.mxu0 0
        %1707 = vmatprep.subr.bf16.mxu0 0
        %1708 = vmatpush2.bf16.xpose.msra.mxu0 0
        %1709 = vmatprep.subr.bf16.mxu0 0
        %1710 = vmatpush2.bf16.xpose.msra.mxu0 0
        %1711 = vmatprep.subr.bf16.mxu0 0
        %1712 = vmatpush2.bf16.xpose.msra.mxu0 0
        %1713 = vmatprep.subr.bf16.mxu0 0
        %1714 = vmatpush2.bf16.xpose.msra.mxu0 0
        %1715 = vmatprep.subr.bf16.mxu0 0
        %1716 = vmatpush2.bf16.xpose.msra.mxu0 0
        %1717 = vmatprep.subr.bf16.mxu0 0
        %1718 = vmatpush2.bf16.xpose.msra.mxu0 0
        %1719 = vmatprep.subr.bf16.mxu0 0
        %1720 = vmatpush2.bf16.xpose.msra.mxu0 0
        %1721 = vmatprep.mubr.bf16.mxu0 0
        %1722 = vmatmul.mubr.bf16.gmra.mxu0 %v1684
        %v1723 = vpop.f32.mrf.mxu0
        %v1724 = vadd.f32 0.0, %v1723
        %v1725 = vpop.f32.mrf.mxu0
        %v1726 = vpop.f32.mrf.mxu0
        %v1727 = vpop.f32.mrf.mxu0
        %1728 = vdwg.mxu0
        %v1729 = vsel %vm1058, %v1674, -1e+09
        %v1730 = vsel %vm1059, %v1724, -1e+09
        %v1731 = vsel %vm952, %v1729, -inf
        %1732 = vmax.xlane.f32.xlu0 %v1731
        %v1733 = vpop.xlane.xlu0 %1732
        %v1734 = vsel %vm952, %v1730, -inf
        %1735 = vmax.xlane.f32.xlu0 %v1734
        %v1736 = vpop.xlane.xlu0 %1735
        %v1737 = vsub.f32 %v1729, %v1733
        %v1738 = vsub.f32 %v1730, %v1736
        %v1739 = vmul.f32 %v1737, 1.442695
        %v1740 = vpow.pop %v1739
        %v1741 = vmul.f32 %v1738, 1.442695
        %v1742 = vpow.pop %v1741
        %v1743 = vsel %vm952, %v1740, 0.0
        %1744 = vadd.xlane.f32.xlu0 %v1743
        %v1745 = vpop.xlane.xlu0 %1744
        %v1746 = vsel %vm952, %v1742, 0.0
        %1747 = vadd.xlane.f32.xlu0 %v1746
        %v1748 = vpop.xlane.xlu0 %1747
        %v1749 = vrcp.pop %v1745
        %v1750 = vrcp.pop %v1748
        %v1751 = vmul.f32 %v1740, %v1749
        %v1752 = vmul.f32 %v1742, %v1750
        %v1753 = vpack.c.bf16 %v1751, %v1751
        %v1754 = vpack.c.bf16 %v1752, %v1752
        %1755 = vrot.lane.b32.xlu0 %v943, 40
        %v1756 = vpop.permute.xlu0 %1755
        %v1758 = vsel %vm952, %v1753, 0
        %v1761 = vsel %vm1091, %v1756, 0
        %1763 = vmatprep.subr.bf16.mxu0 0
        %1764 = vmatpush1.bf16.msra.mxu0 0
        %1765 = vmatprep.subr.bf16.mxu0 0
        %1766 = vmatpush1.bf16.msra.mxu0 0
        %1767 = vmatprep.subr.bf16.mxu0 0
        %1768 = vmatpush1.bf16.msra.mxu0 0
        %1769 = vmatprep.subr.bf16.mxu0 0
        %1770 = vmatpush1.bf16.msra.mxu0 0
        %1771 = vmatprep.subr.bf16.mxu0 0
        %1772 = vmatpush1.bf16.msra.mxu0 0
        %1773 = vmatprep.subr.bf16.mxu0 0
        %1774 = vmatpush1.bf16.msra.mxu0 0
        %1775 = vmatprep.subr.bf16.mxu0 0
        %1776 = vmatpush1.bf16.msra.mxu0 0
        %1777 = vmatprep.subr.bf16.mxu0 0
        %1778 = vmatpush1.bf16.msra.mxu0 %v1761
        %1779 = vmatprep.subr.bf16.mxu0 0
        %1780 = vmatpush2.bf16.msra.mxu0 0
        %1781 = vmatprep.subr.bf16.mxu0 0
        %1782 = vmatpush2.bf16.msra.mxu0 0
        %1783 = vmatprep.subr.bf16.mxu0 0
        %1784 = vmatpush2.bf16.msra.mxu0 0
        %1785 = vmatprep.subr.bf16.mxu0 0
        %1786 = vmatpush2.bf16.msra.mxu0 0
        %1787 = vmatprep.subr.bf16.mxu0 0
        %1788 = vmatpush2.bf16.msra.mxu0 0
        %1789 = vmatprep.subr.bf16.mxu0 0
        %1790 = vmatpush2.bf16.msra.mxu0 0
        %1791 = vmatprep.subr.bf16.mxu0 0
        %1792 = vmatpush2.bf16.msra.mxu0 0
        %1793 = vmatprep.subr.bf16.mxu0 0
        %1794 = vmatpush2.bf16.msra.mxu0 0
        %1795 = vmatprep.mubr.bf16.mxu0 0
        %1796 = vmatmul.mubr.bf16.gmra.mxu0 %v1758
        %v1797 = vpop.f32.mrf.mxu0
        %v1798 = vadd.f32 0.0, %v1797
        %v1799 = vpop.f32.mrf.mxu0
        %v1800 = vpop.f32.mrf.mxu0
        %v1801 = vpop.f32.mrf.mxu0
        %1802 = vdwg.mxu0
        %1803 = vrot.lane.b32.xlu0 %v944, 40
        %v1804 = vpop.permute.xlu0 %1803
        %v1806 = vsel %vm952, %v1754, 0
        %v1809 = vsel %vm1091, %v1804, 0
        %1811 = vmatprep.subr.bf16.mxu0 0
        %1812 = vmatpush1.bf16.msra.mxu0 0
        %1813 = vmatprep.subr.bf16.mxu0 0
        %1814 = vmatpush1.bf16.msra.mxu0 0
        %1815 = vmatprep.subr.bf16.mxu0 0
        %1816 = vmatpush1.bf16.msra.mxu0 0
        %1817 = vmatprep.subr.bf16.mxu0 0
        %1818 = vmatpush1.bf16.msra.mxu0 0
        %1819 = vmatprep.subr.bf16.mxu0 0
        %1820 = vmatpush1.bf16.msra.mxu0 0
        %1821 = vmatprep.subr.bf16.mxu0 0
        %1822 = vmatpush1.bf16.msra.mxu0 0
        %1823 = vmatprep.subr.bf16.mxu0 0
        %1824 = vmatpush1.bf16.msra.mxu0 0
        %1825 = vmatprep.subr.bf16.mxu0 0
        %1826 = vmatpush1.bf16.msra.mxu0 %v1809
        %1827 = vmatprep.subr.bf16.mxu0 0
        %1828 = vmatpush2.bf16.msra.mxu0 0
        %1829 = vmatprep.subr.bf16.mxu0 0
        %1830 = vmatpush2.bf16.msra.mxu0 0
        %1831 = vmatprep.subr.bf16.mxu0 0
        %1832 = vmatpush2.bf16.msra.mxu0 0
        %1833 = vmatprep.subr.bf16.mxu0 0
        %1834 = vmatpush2.bf16.msra.mxu0 0
        %1835 = vmatprep.subr.bf16.mxu0 0
        %1836 = vmatpush2.bf16.msra.mxu0 0
        %1837 = vmatprep.subr.bf16.mxu0 0
        %1838 = vmatpush2.bf16.msra.mxu0 0
        %1839 = vmatprep.subr.bf16.mxu0 0
        %1840 = vmatpush2.bf16.msra.mxu0 0
        %1841 = vmatprep.subr.bf16.mxu0 0
        %1842 = vmatpush2.bf16.msra.mxu0 0
        %1843 = vmatprep.mubr.bf16.mxu0 0
        %1844 = vmatmul.mubr.bf16.gmra.mxu0 %v1806
        %v1845 = vpop.f32.mrf.mxu0
        %v1846 = vadd.f32 0.0, %v1845
        %v1847 = vpop.f32.mrf.mxu0
        %v1848 = vpop.f32.mrf.mxu0
        %v1849 = vpop.f32.mrf.mxu0
        %1850 = vdwg.mxu0
        %1853 = vrot.lane.b32.xlu0 %v1354, 8
        %v1854 = vpop.permute.xlu0 %1853
        %1855 = vrot.lane.b32.xlu0 %v1402, 8
        %v1856 = vpop.permute.xlu0 %1855
        %1861 = vrot.lane.b32.xlu0 %v1576, 16
        %v1862 = vpop.permute.xlu0 %1861
        %1863 = vrot.lane.b32.xlu0 %v1624, 16
        %v1864 = vpop.permute.xlu0 %1863
        %1869 = vrot.lane.b32.xlu0 %v1798, 24
        %v1870 = vpop.permute.xlu0 %1869
        %1871 = vrot.lane.b32.xlu0 %v1846, 24
        %v1872 = vpop.permute.xlu0 %1871
        %v1875 = vsel %vm952, %v1130, %v1854
        %v1876 = vsel %vm952, %v1178, %v1856
        %vm1877 = vcmask 130048
        %v1878 = vsel %vm1877, %v1875, %v1862
        %v1879 = vsel %vm1877, %v1876, %v1864
        %vm1880 = vcmask 195584
        %v1881 = vsel %vm1880, %v1878, %v1870
        %v1882 = vsel %vm1880, %v1879, %v1872
        %v1883 = vpack.c.bf16 %v1882, %v1881
        %v1884 = vld [vmem:[%s785] sm:$0xf]
        %v1885 = vld [vmem:[%s785 + $0x4] sm:$0xf]
        %v1886 = vld [vmem:[%s785 + $0x8] sm:$0xf]
        %v1887 = vld [vmem:[%s785 + $0xc] sm:$0xf]
        %v1888 = vld [vmem:[%s788] sm:$0x1]
        %v1890 = vlaneseq
        %v1891 = vshrl.u32 %v1890, 7
        %v1892 = vsub.s32 0, %v1891
        %v1893 = vrot.slane %v1888, %v1892
        %v1899 = vunpack.c.l.b16 %v1884
        %v1900 = vunpack.c.l.b16 %v1885
        %v1901 = vunpack.c.l.b16 %v1886
        %v1902 = vunpack.c.l.b16 %v1887
        %v1903 = vpack.c.b16 %v1900, %v1899
        %v1904 = vpack.c.b16 %v1902, %v1901
        %v1908 = vsel %vm894, %v1883, 0
        %1910 = vmatprep.subr.bf16.mxu0 0
        %1911 = vmatpush1.bf16.msra.mxu0 0
        %1912 = vmatprep.subr.bf16.mxu0 0
        %1913 = vmatpush1.bf16.msra.mxu0 0
        %1914 = vmatprep.subr.bf16.mxu0 0
        %1915 = vmatpush1.bf16.msra.mxu0 0
        %1916 = vmatprep.subr.bf16.mxu0 0
        %1917 = vmatpush1.bf16.msra.mxu0 0
        %1918 = vmatprep.subr.bf16.mxu0 0
        %1919 = vmatpush1.bf16.msra.mxu0 0
        %1920 = vmatprep.subr.bf16.mxu0 0
        %1921 = vmatpush1.bf16.msra.mxu0 0
        %1922 = vmatprep.subr.bf16.mxu0 0
        %1923 = vmatpush1.bf16.msra.mxu0 %v1904
        %1924 = vmatprep.subr.bf16.mxu0 0
        %1925 = vmatpush1.bf16.msra.mxu0 %v1903
        %1926 = vmatprep.subr.bf16.mxu0 0
        %1927 = vmatpush2.bf16.msra.mxu0 0
        %1928 = vmatprep.subr.bf16.mxu0 0
        %1929 = vmatpush2.bf16.msra.mxu0 0
        %1930 = vmatprep.subr.bf16.mxu0 0
        %1931 = vmatpush2.bf16.msra.mxu0 0
        %1932 = vmatprep.subr.bf16.mxu0 0
        %1933 = vmatpush2.bf16.msra.mxu0 0
        %1934 = vmatprep.subr.bf16.mxu0 0
        %1935 = vmatpush2.bf16.msra.mxu0 0
        %1936 = vmatprep.subr.bf16.mxu0 0
        %1937 = vmatpush2.bf16.msra.mxu0 0
        %1938 = vmatprep.subr.bf16.mxu0 0
        %1939 = vmatpush2.bf16.msra.mxu0 0
        %1940 = vmatprep.subr.bf16.mxu0 0
        %1941 = vmatpush2.bf16.msra.mxu0 0
        %1942 = vmatprep.mubr.bf16.mxu0 0
        %1943 = vmatmul.mubr.bf16.gmra.mxu0 %v1908
        %v1944 = vpop.f32.mrf.mxu0
        %v1945 = vadd.f32 %v1893, %v1944
        %v1946 = vpop.f32.mrf.mxu0
        %v1947 = vpop.f32.mrf.mxu0
        %v1948 = vadd.f32 %v1893, %v1947
        %v1949 = vpop.f32.mrf.mxu0
        %1950 = vdwg.mxu0
        %v1951 = vadd.f32 %v1945, %v868
        %v1952 = vadd.f32 %v1948, %v869
        %v1953 = vld [vmem:[%s791] sm:$0x1]
        %v1954 = vld [vmem:[%s794] sm:$0x1]
        %v1955 = vsel %vm894, %v1951, 0.0
        %1956 = vadd.xlane.f32.xlu0 %v1955
        %v1957 = vpop.xlane.xlu0 %1956
        %v1958 = vsel %vm894, %v1952, 0.0
        %1959 = vadd.xlane.f32.xlu0 %v1958
        %v1960 = vpop.xlane.xlu0 %1959
        %v1961 = vrcp.pop 32.0
        %v1962 = vmul.f32 %v1957, %v1961
        %v1963 = vmul.f32 %v1960, %v1961
        %v1964 = vsub.f32 %v1951, %v1962
        %v1965 = vsub.f32 %v1952, %v1963
        %v1966 = vmul.f32 %v1964, %v1964
        %v1967 = vmul.f32 %v1965, %v1965
        %v1968 = vsel %vm894, %v1966, 0.0
        %1969 = vadd.xlane.f32.xlu0 %v1968
        %v1970 = vpop.xlane.xlu0 %1969
        %v1971 = vsel %vm894, %v1967, 0.0
        %1972 = vadd.xlane.f32.xlu0 %v1971
        %v1973 = vpop.xlane.xlu0 %1972
        %v1974 = vmul.f32 %v1970, %v1961
        %v1975 = vmul.f32 %v1973, %v1961
        %v1976 = vadd.f32 %v1974, 1e-12
        %v1977 = vadd.f32 %v1975, 1e-12
        %v1978 = vrsqrt.pop %v1976
        %v1979 = vrsqrt.pop %v1977
        %v1980 = vmul.f32 %v1964, %v1978
        %v1981 = vmul.f32 %v1965, %v1979
        %v1983 = vlaneseq
        %v1984 = vshrl.u32 %v1983, 7
        %v1985 = vsub.s32 0, %v1984
        %v1986 = vrot.slane %v1953, %v1985
        %v1988 = vmul.f32 %v1986, %v1980
        %v1989 = vmul.f32 %v1986, %v1981
        %v1991 = vlaneseq
        %v1992 = vshrl.u32 %v1991, 7
        %v1993 = vsub.s32 0, %v1992
        %v1994 = vrot.slane %v1954, %v1993
        %v1996 = vadd.f32 %v1988, %v1994
        %v1997 = vadd.f32 %v1989, %v1994
        %v1998 = vpack.c.bf16 %v1997, %v1996
        %v1999 = vld [vmem:[%s668] sm:$0xf]
        %v2000 = vld [vmem:[%s668 + $0x4] sm:$0xf]
        %v2001 = vld [vmem:[%s668 + $0x8] sm:$0xf]
        %v2002 = vld [vmem:[%s668 + $0xc] sm:$0xf]
        %v2003 = vld [vmem:[%s797] sm:$0x1]
        %v2005 = vlaneseq
        %v2006 = vshrl.u32 %v2005, 7
        %v2007 = vsub.s32 0, %v2006
        %v2008 = vrot.slane %v2003, %v2007
        %v2014 = vunpack.c.l.b16 %v1999
        %v2015 = vunpack.c.l.b16 %v2000
        %v2016 = vunpack.c.l.b16 %v2001
        %v2017 = vunpack.c.l.b16 %v2002
        %v2018 = vpack.c.b16 %v2015, %v2014
        %v2019 = vpack.c.b16 %v2017, %v2016
        %v2023 = vsel %vm894, %v1998, 0
        %2025 = vmatprep.subr.bf16.mxu0 0
        %2026 = vmatpush1.bf16.msra.mxu0 0
        %2027 = vmatprep.subr.bf16.mxu0 0
        %2028 = vmatpush1.bf16.msra.mxu0 0
        %2029 = vmatprep.subr.bf16.mxu0 0
        %2030 = vmatpush1.bf16.msra.mxu0 0
        %2031 = vmatprep.subr.bf16.mxu0 0
        %2032 = vmatpush1.bf16.msra.mxu0 0
        %2033 = vmatprep.subr.bf16.mxu0 0
        %2034 = vmatpush1.bf16.msra.mxu0 0
        %2035 = vmatprep.subr.bf16.mxu0 0
        %2036 = vmatpush1.bf16.msra.mxu0 0
        %2037 = vmatprep.subr.bf16.mxu0 0
        %2038 = vmatpush1.bf16.msra.mxu0 %v2019
        %2039 = vmatprep.subr.bf16.mxu0 0
        %2040 = vmatpush1.bf16.msra.mxu0 %v2018
        %2041 = vmatprep.subr.bf16.mxu0 0
        %2042 = vmatpush2.bf16.msra.mxu0 0
        %2043 = vmatprep.subr.bf16.mxu0 0
        %2044 = vmatpush2.bf16.msra.mxu0 0
        %2045 = vmatprep.subr.bf16.mxu0 0
        %2046 = vmatpush2.bf16.msra.mxu0 0
        %2047 = vmatprep.subr.bf16.mxu0 0
        %2048 = vmatpush2.bf16.msra.mxu0 0
        %2049 = vmatprep.subr.bf16.mxu0 0
        %2050 = vmatpush2.bf16.msra.mxu0 0
        %2051 = vmatprep.subr.bf16.mxu0 0
        %2052 = vmatpush2.bf16.msra.mxu0 0
        %2053 = vmatprep.subr.bf16.mxu0 0
        %2054 = vmatpush2.bf16.msra.mxu0 0
        %2055 = vmatprep.subr.bf16.mxu0 0
        %2056 = vmatpush2.bf16.msra.mxu0 0
        %2057 = vmatprep.mubr.bf16.mxu0 0
        %2058 = vmatmul.mubr.bf16.gmra.mxu0 %v2023
        %v2059 = vpop.f32.mrf.mxu0
        %v2060 = vadd.f32 %v2008, %v2059
        %v2061 = vpop.f32.mrf.mxu0
        %v2062 = vpop.f32.mrf.mxu0
        %v2063 = vadd.f32 %v2008, %v2062
        %v2064 = vpop.f32.mrf.mxu0
        %2065 = vdwg.mxu0
        %v2066 = vmul.f32 %v2060, 0.5
        %v2067 = vmul.f32 %v2063, 0.5
        %v2068 = vmul.f32 %v2060, 0.044715
        %v2069 = vmul.f32 %v2063, 0.044715
        %v2070 = vmul.f32 %v2068, %v2060
        %v2071 = vmul.f32 %v2069, %v2063
        %v2072 = vmul.f32 %v2070, %v2060
        %v2073 = vmul.f32 %v2071, %v2063
        %v2074 = vadd.f32 %v2060, %v2072
        %v2075 = vadd.f32 %v2063, %v2073
        %v2076 = vmul.f32 %v2074, 0.7978846
        %v2077 = vmul.f32 %v2075, 0.7978846
        %v2078 = vtanh.pop %v2076
        %v2079 = vtanh.pop %v2077
        %v2080 = vadd.f32 %v2078, 1.0
        %v2081 = vadd.f32 %v2079, 1.0
        %v2082 = vmul.f32 %v2066, %v2080
        %v2083 = vmul.f32 %v2067, %v2081
        %v2084 = vpack.c.bf16 %v2083, %v2082
        %v2085 = vld [vmem:[%s802] sm:$0xf]
        %v2086 = vld [vmem:[%s802 + $0x4] sm:$0xf]
        %v2087 = vld [vmem:[%s802 + $0x8] sm:$0xf]
        %v2088 = vld [vmem:[%s802 + $0xc] sm:$0xf]
        %v2089 = vld [vmem:[%s802 + $0x10] sm:$0xf]
        %v2090 = vld [vmem:[%s802 + $0x14] sm:$0xf]
        %v2091 = vld [vmem:[%s802 + $0x18] sm:$0xf]
        %v2092 = vld [vmem:[%s802 + $0x1c] sm:$0xf]
        %v2093 = vld [vmem:[%s805] sm:$0x1]
        %v2095 = vlaneseq
        %v2096 = vshrl.u32 %v2095, 7
        %v2097 = vsub.s32 0, %v2096
        %v2098 = vrot.slane %v2093, %v2097
        %v2108 = vunpack.c.l.b16 %v2085
        %v2109 = vunpack.c.l.b16 %v2086
        %v2110 = vunpack.c.l.b16 %v2087
        %v2111 = vunpack.c.l.b16 %v2088
        %v2112 = vunpack.c.l.b16 %v2089
        %v2113 = vunpack.c.l.b16 %v2090
        %v2114 = vunpack.c.l.b16 %v2091
        %v2115 = vunpack.c.l.b16 %v2092
        %v2116 = vpack.c.b16 %v2109, %v2108
        %v2117 = vpack.c.b16 %v2111, %v2110
        %v2118 = vpack.c.b16 %v2113, %v2112
        %v2119 = vpack.c.b16 %v2115, %v2114
        %vm2124 = vcmask 523264
        %v2126 = vsel %vm2124, %v2084, 0
        %2128 = vmatprep.subr.bf16.mxu0 0
        %2129 = vmatpush1.bf16.msra.mxu0 0
        %2130 = vmatprep.subr.bf16.mxu0 0
        %2131 = vmatpush1.bf16.msra.mxu0 0
        %2132 = vmatprep.subr.bf16.mxu0 0
        %2133 = vmatpush1.bf16.msra.mxu0 0
        %2134 = vmatprep.subr.bf16.mxu0 0
        %2135 = vmatpush1.bf16.msra.mxu0 0
        %2136 = vmatprep.subr.bf16.mxu0 0
        %2137 = vmatpush1.bf16.msra.mxu0 %v2119
        %2138 = vmatprep.subr.bf16.mxu0 0
        %2139 = vmatpush1.bf16.msra.mxu0 %v2118
        %2140 = vmatprep.subr.bf16.mxu0 0
        %2141 = vmatpush1.bf16.msra.mxu0 %v2117
        %2142 = vmatprep.subr.bf16.mxu0 0
        %2143 = vmatpush1.bf16.msra.mxu0 %v2116
        %2144 = vmatprep.subr.bf16.mxu0 0
        %2145 = vmatpush2.bf16.msra.mxu0 0
        %2146 = vmatprep.subr.bf16.mxu0 0
        %2147 = vmatpush2.bf16.msra.mxu0 0
        %2148 = vmatprep.subr.bf16.mxu0 0
        %2149 = vmatpush2.bf16.msra.mxu0 0
        %2150 = vmatprep.subr.bf16.mxu0 0
        %2151 = vmatpush2.bf16.msra.mxu0 0
        %2152 = vmatprep.subr.bf16.mxu0 0
        %2153 = vmatpush2.bf16.msra.mxu0 0
        %2154 = vmatprep.subr.bf16.mxu0 0
        %2155 = vmatpush2.bf16.msra.mxu0 0
        %2156 = vmatprep.subr.bf16.mxu0 0
        %2157 = vmatpush2.bf16.msra.mxu0 0
        %2158 = vmatprep.subr.bf16.mxu0 0
        %2159 = vmatpush2.bf16.msra.mxu0 0
        %2160 = vmatprep.mubr.bf16.mxu0 0
        %2161 = vmatmul.mubr.bf16.gmra.mxu0 %v2126
        %v2162 = vpop.f32.mrf.mxu0
        %v2163 = vadd.f32 %v2098, %v2162
        %v2164 = vpop.f32.mrf.mxu0
        %v2165 = vpop.f32.mrf.mxu0
        %v2166 = vadd.f32 %v2098, %v2165
        %v2167 = vpop.f32.mrf.mxu0
        %2168 = vdwg.mxu0
        %v2169 = vadd.f32 %v2163, %v1996
        %v2170 = vadd.f32 %v2166, %v1997
        %v2171 = vld [vmem:[%s808] sm:$0x1]
        %v2172 = vld [vmem:[%s811] sm:$0x1]
        %v2173 = vsel %vm894, %v2169, 0.0
        %2174 = vadd.xlane.f32.xlu0 %v2173
        %v2175 = vpop.xlane.xlu0 %2174
        %v2176 = vsel %vm894, %v2170, 0.0
        %2177 = vadd.xlane.f32.xlu0 %v2176
        %v2178 = vpop.xlane.xlu0 %2177
        %v2179 = vmul.f32 %v2175, %v1961
        %v2180 = vmul.f32 %v2178, %v1961
        %v2181 = vsub.f32 %v2169, %v2179
        %v2182 = vsub.f32 %v2170, %v2180
        %v2183 = vmul.f32 %v2181, %v2181
        %v2184 = vmul.f32 %v2182, %v2182
        %v2185 = vsel %vm894, %v2183, 0.0
        %2186 = vadd.xlane.f32.xlu0 %v2185
        %v2187 = vpop.xlane.xlu0 %2186
        %v2188 = vsel %vm894, %v2184, 0.0
        %2189 = vadd.xlane.f32.xlu0 %v2188
        %v2190 = vpop.xlane.xlu0 %2189
        %v2191 = vmul.f32 %v2187, %v1961
        %v2192 = vmul.f32 %v2190, %v1961
        %v2193 = vadd.f32 %v2191, 1e-12
        %v2194 = vadd.f32 %v2192, 1e-12
        %v2195 = vrsqrt.pop %v2193
        %v2196 = vrsqrt.pop %v2194
        %v2197 = vmul.f32 %v2181, %v2195
        %v2198 = vmul.f32 %v2182, %v2196
        %v2200 = vlaneseq
        %v2201 = vshrl.u32 %v2200, 7
        %v2202 = vsub.s32 0, %v2201
        %v2203 = vrot.slane %v2171, %v2202
        %v2205 = vmul.f32 %v2203, %v2197
        %v2206 = vmul.f32 %v2203, %v2198
        %v2208 = vlaneseq
        %v2209 = vshrl.u32 %v2208, 7
        %v2210 = vsub.s32 0, %v2209
        %v2211 = vrot.slane %v2172, %v2210
        %v2213 = vadd.f32 %v2205, %v2211
        %v2214 = vadd.f32 %v2206, %v2211
        %2215 = vst.msk [vmem:[%s765] sm:$0xff] %vm894, %v2213
        %2216 = vst.msk [vmem:[%s765 + $0x8] sm:$0xff] %vm894, %v2214
        %s2217 = sand.u32 %s463, 1
        %s2218 = scalar_lea.sflag [#allocation4], %s2217
        %s2219 = sand.u32 %s463, 1
        %s2220 = smul.addr %s2219, 16
        %s2221 = scalar_lea.vmem [#allocation10], %s2220
        // Predicated region
        $region105: #{tpu_custom_call.1} parent=83 // pred_check
          %p2222 = pneg %p473
        $region106: #{tpu_custom_call.1} parent=83 // pred_check_branch
          %2224 = sbr.rel (%p2222) target = $region108
        $region107: #{tpu_custom_call.1} parent=83 // pred_region
          %s2225 = smul.u32 2, %s41
          %s2227 = ssub.s32 256, 256
          %2228 = vsyncadd %s2218, %s2227
          %s2229 = smul.addr %s2225, 128
          %s2230 = scalar_lea.hbm %s16, %s2229
          %s2231 = sshll.u32 %s2221, 4
          %s2232 = int_to_ptr.vmem [resolvable:$true] %s2231
          %2237 = dma.vmem_to_hbm [thread:$0]  %s2232, 256, %s2230, %s2218, 128, 128, 8
        $region108: #{tpu_custom_call.1} parent=83 // pred_fallthru
          _
      $region84: #{tpu_custom_call.1} parent=5 // pred_fallthru
        _
      %p2238 = scmp.le.s32.totalorder 2, %s32
      // Predicated region
      $region109: #{tpu_custom_call.1} parent=5 // pred_check
        %p2239 = pneg %p2238
      $region110: #{tpu_custom_call.1} parent=5 // pred_check_branch
        %2241 = sbr.rel (%p2239) target = $region112
      $region111: #{tpu_custom_call.1} parent=5 // pred_region
        %s2242 = ssub.s32 %s32, 2
        // Predicated region
        $region113: #{tpu_custom_call.1} parent=111 // pred_check
          %p2243 = pneg %p479
        $region114: #{tpu_custom_call.1} parent=111 // pred_check_branch
          %2245 = sbr.rel (%p2243) target = $region116
        $region115: #{tpu_custom_call.1} parent=111 // pred_region
          %s2246 = sand.u32 %s464, 1
          %s2247 = scalar_lea.sflag [#allocation4], %s2246
          %s2248 = sand.u32 %s464, 1
          %s2249 = smul.addr %s2248, 16
          %s2250 = scalar_lea.vmem [#allocation10], %s2249
          %2251 = dma.done %s2247, 256
        $region116: #{tpu_custom_call.1} parent=111 // pred_fallthru
          _
      $region112: #{tpu_custom_call.1} parent=5 // pred_fallthru
        _
    $region6: #{tpu_custom_call.1} parent=1 // loop_footer
      %s36 = sadd.s32 1, %s32
    $region7: #{tpu_custom_call.1} parent=1 // loop_footer_branch
      %31 = sbr.rel target = $region3
    $region8: #{tpu_custom_call.1} parent=1 // loop_exit
      _
    %2252 = vsyncpa [#allocation3], 1
    %s2253 = scalar_lea.sflag [#allocation3], 1
    %2254 = vsyncpa %s2253, 1
    %2255 = vsyncpa [#allocation6], 1
    %2256 = vsyncpa [#allocation9], 1
    %s2257 = scalar_lea.sflag [#allocation9], 1
    %2258 = vsyncpa %s2257, 1
    %2259 = vsyncpa [#allocation4], 1
    %s2260 = scalar_lea.sflag [#allocation4], 1
    %2261 = vsyncpa %s2260, 1

</llo_original>
